<compile_context>
chip_gen: v6e
topology: v6e:2x2x1
jax: 0.10.0
libtpu: 0.0.40
codegen_flags: <defaults>
</compile_context>

<pallas_src>
import jax
import jax.numpy as jnp
from jax.experimental import pallas as pl
from jax.experimental.pallas import tpu as pltpu

# ---- small synthetic config (constants dict of the PyTorch module) ----
NT, N = 2, 8
LS = NT * N                      # Ls = Nt * N = 16
LW = 8                           # length of w_batch
LY = 8                           # length of y
N_STEP = 3
MODULUS = 1.0
BATCH = 2
IN_DIM = 2 * LS + 2 * LW + LY    # 56
WY_DIM = 2 * LW + LY             # 24 (constant part of the MLP input)
HIDDEN = 16
S_OUT_DIM = 2 * (N_STEP + 1) * LS   # 128 — lane-dense output slab
RHO_PAD = 128                        # rho row padded to full lane width


def _srel_kernel(phi_ref, wy_ref, Mt_ref,
                 W1s_ref, W1c_ref, b1_ref, W2T_ref, b2_ref,
                 s_out_ref, rho_out_ref):
    TB = phi_ref.shape[0]                      # static batch-tile size
    phi = phi_ref[...]                         # (TB, LS)
    wy = wy_ref[...]                           # (TB, WY_DIM) = [w_re | w_im | y]

    # Hoist the (w, y) contribution of every step's first Linear out of the
    # step loop:  const[s] = [w_re|w_im|y] @ W1[s, 2*Ls:, :] + b1[s]
    const_terms = [
        jnp.dot(wy, W1c_ref[s], preferred_element_type=jnp.float32) + b1_ref[s]
        for s in range(N_STEP)
    ]                                          # each (TB, HIDDEN)

    s_chunks = []
    rho_chunks = []
    for step in range(N_STEP):
        # s = modulus * exp(i * phi)
        s_re = MODULUS * jnp.cos(phi)                              # (TB, LS)
        s_im = MODULUS * jnp.sin(phi)
        s_aug = jnp.concatenate([s_re, s_im], axis=-1)             # (TB, 2*LS)
        s_chunks.append(s_aug)

        # eta_sred on the MXU:  [As_re | As_im] = s_aug @ Mt  (per batch item,
        # Mt differs per item so unroll the small static batch tile).
        # TODO(synk): eta_sred assumed = 2*Im(conj(s) * ((G+H) @ s)).
        As_rows = [
            jnp.dot(s_aug[b:b + 1, :], Mt_ref[b],
                    preferred_element_type=jnp.float32)            # (1, 2*LS)
            for b in range(TB)
        ]
        As_aug = jnp.concatenate(As_rows, axis=0)                  # (TB, 2*LS)
        As_re = As_aug[:, :LS]
        As_im = As_aug[:, LS:]
        eta = 2.0 * (s_re * As_im - s_im * As_re)                  # (TB, LS)

        # Estimate_rho[step]: Linear -> ReLU -> Linear -> Sigmoid
        # (only the phi-dependent K=2*Ls contraction remains in the loop)
        h = jnp.maximum(
            jnp.dot(s_aug, W1s_ref[step], preferred_element_type=jnp.float32)
            + const_terms[step], 0.0)                              # (TB, HIDDEN)
        z = (jnp.dot(h, W2T_ref[step], preferred_element_type=jnp.float32)
             + b2_ref[step])                                       # (TB, 1)
        rho = 1.0 / (1.0 + jnp.exp(-z))                            # sigmoid
        rho_chunks.append(rho)

        # phi <- phi - rho * eta
        phi = phi - rho * eta

    # final s at index N_step
    s_chunks.append(jnp.concatenate(
        [MODULUS * jnp.cos(phi), MODULUS * jnp.sin(phi)], axis=-1))

    # Single lane-dense stores: one 128-lane s slab + one 128-lane rho row.
    s_out_ref[...] = jnp.concatenate(s_chunks, axis=-1)            # (TB, 128)
    rho_pad = jnp.zeros((TB, RHO_PAD - N_STEP), jnp.float32)
    rho_out_ref[...] = jnp.concatenate(rho_chunks + [rho_pad], axis=-1)


def init_params(key):
    """Deterministic nn.Linear-style init for the N_step Estimate_rho heads."""
    k1, k2, k3, k4 = jax.random.split(key, 4)
    bnd1 = 1.0 / (IN_DIM ** 0.5)
    bnd2 = 1.0 / (HIDDEN ** 0.5)
    W1 = jax.random.uniform(k1, (N_STEP, IN_DIM, HIDDEN), jnp.float32, -bnd1, bnd1)
    b1 = jax.random.uniform(k2, (N_STEP, 1, HIDDEN), jnp.float32, -bnd1, bnd1)
    W2 = jax.random.uniform(k3, (N_STEP, 1, HIDDEN), jnp.float32, -bnd2, bnd2)
    b2 = jax.random.uniform(k4, (N_STEP, 1, 1), jnp.float32, -bnd2, bnd2)
    return W1, b1, W2, b2


def srel_intra_phase1_vary_rho(phi, w, y, G, H, params):
    """Forward pass. phi: (B, Ls) f32; w: (B, Lw) c64; y: (Ly,) f32;
    G, H: (B, Ls, Ls) c64. Returns dict with complex s_stack and real rho_stack."""
    W1, b1, W2, b2 = params
    B = phi.shape[0]

    # batch tile: whole batch in one grid step for small B, else tiles of 8
    TB = B if B <= 8 else 8
    assert B % TB == 0, "batch must be a multiple of the batch tile"

    # --- one-time input layout prep (outside the unfolded loop) ---
    phi_f = phi.astype(jnp.float32)                                 # (B, Ls)
    w_re = jnp.real(w).astype(jnp.float32)
    w_im = jnp.imag(w).astype(jnp.float32)
    y_b = jnp.tile(y[None, :].astype(jnp.float32), (B, 1))          # y.repeat(batch, 1)
    wy = jnp.concatenate([w_re, w_im, y_b], axis=1)                  # (B, WY_DIM)

    A = G + H                                                        # step-invariant
    A_re_T = jnp.swapaxes(jnp.real(A).astype(jnp.float32), 1, 2)
    A_im_T = jnp.swapaxes(jnp.imag(A).astype(jnp.float32), 1, 2)
    # Mt[b] = A_aug[b]^T with A_aug = [[A_re, -A_im], [A_im, A_re]]
    Mt = jnp.concatenate(
        [jnp.concatenate([A_re_T, A_im_T], axis=2),
         jnp.concatenate([-A_im_T, A_re_T], axis=2)], axis=1)        # (B, 2Ls, 2Ls)

    # Split / re-layout the per-step MLP weights once.
    W1s = W1[:, :2 * LS, :]          # phi-dependent rows   (N_STEP, 2*Ls, HIDDEN)
    W1c = W1[:, 2 * LS:, :]          # (w, y) rows          (N_STEP, WY_DIM, HIDDEN)
    W2T = jnp.swapaxes(W2, 1, 2)     # (N_STEP, HIDDEN, 1)

    out_shape = (
        jax.ShapeDtypeStruct((B, S_OUT_DIM), jnp.float32),   # packed s slab
        jax.ShapeDtypeStruct((B, RHO_PAD), jnp.float32),     # rho row (padded)
    )
    in_specs = [
        pl.BlockSpec((TB, LS), lambda i: (i, 0)),
        pl.BlockSpec((TB, WY_DIM), lambda i: (i, 0)),
        pl.BlockSpec((TB, 2 * LS, 2 * LS), lambda i: (i, 0, 0)),
        pl.BlockSpec((N_STEP, 2 * LS, HIDDEN), lambda i: (0, 0, 0)),
        pl.BlockSpec((N_STEP, WY_DIM, HIDDEN), lambda i: (0, 0, 0)),
        pl.BlockSpec((N_STEP, 1, HIDDEN), lambda i: (0, 0, 0)),
        pl.BlockSpec((N_STEP, HIDDEN, 1), lambda i: (0, 0, 0)),
        pl.BlockSpec((N_STEP, 1, 1), lambda i: (0, 0, 0)),
    ]
    out_specs = (
        pl.BlockSpec((TB, S_OUT_DIM), lambda i: (i, 0)),
        pl.BlockSpec((TB, RHO_PAD), lambda i: (i, 0)),
    )

    s_flat, rho_pad = pl.pallas_call(
        _srel_kernel,
        out_shape=out_shape,
        grid=(B // TB,),                          # batch-tile grid
        in_specs=in_specs,
        out_specs=out_specs,
        compiler_params=pltpu.CompilerParams(
            dimension_semantics=("parallel",)),   # v7x: split batch tiles across TCs
    )(phi_f, wy, Mt, W1s, W1c, b1, W2T, b2)

    # unpack lane-dense slab: [step | re/im | Ls]
    s4 = s_flat.reshape(B, N_STEP + 1, 2, LS)
    s_stack = (s4[:, :, 0, :] + 1j * s4[:, :, 1, :]).astype(jnp.complex64)
    rho_stack = rho_pad[:, :N_STEP]
    return {'s_stack_batch': s_stack, 'rho_stack_batch': rho_stack}


if __name__ == "__main__":
    key = jax.random.PRNGKey(0)
    kp, kw1, kw2, ky, kg1, kg2, kh1, kh2, kparam = jax.random.split(key, 9)

    phi = jax.random.uniform(kp, (BATCH, LS), jnp.float32, -3.14159, 3.14159)
    w = (jax.random.normal(kw1, (BATCH, LW), jnp.float32)
         + 1j * jax.random.normal(kw2, (BATCH, LW), jnp.float32)).astype(jnp.complex64)
    y = jax.random.normal(ky, (LY,), jnp.float32)
    G = (jax.random.normal(kg1, (BATCH, LS, LS), jnp.float32)
         + 1j * jax.random.normal(kg2, (BATCH, LS, LS), jnp.float32)).astype(jnp.complex64) * 0.1
    H = (jax.random.normal(kh1, (BATCH, LS, LS), jnp.float32)
         + 1j * jax.random.normal(kh2, (BATCH, LS, LS), jnp.float32)).astype(jnp.complex64) * 0.1

    params = init_params(kparam)

    outs = srel_intra_phase1_vary_rho(phi, w, y, G, H, params)
    jax.block_until_ready(outs)
    assert outs['s_stack_batch'].shape == (BATCH, N_STEP + 1, LS)
    assert outs['s_stack_batch'].dtype == jnp.complex64
    assert outs['rho_stack_batch'].shape == (BATCH, N_STEP)
    assert bool(jnp.all(jnp.isfinite(jnp.abs(outs['s_stack_batch']))))
    assert bool(jnp.all(jnp.isfinite(outs['rho_stack_batch'])))
    print("KERNEL_OK")
</pallas_src>

<mosaic_0001>
module attributes {stable_mosaic.version = 11 : i64} {
  func.func @_srel_kernel(%arg0: i32, %arg1: memref<2x16xf32, #tpu.memory_space<vmem>>, %arg2: memref<2x24xf32, #tpu.memory_space<vmem>>, %arg3: memref<2x32x32xf32, #tpu.memory_space<vmem>>, %arg4: memref<3x32x16xf32, #tpu.memory_space<vmem>>, %arg5: memref<3x24x16xf32, #tpu.memory_space<vmem>>, %arg6: memref<3x1x16xf32, #tpu.memory_space<vmem>>, %arg7: memref<3x16x1xf32, #tpu.memory_space<vmem>>, %arg8: memref<3x1x1xf32, #tpu.memory_space<vmem>>, %arg9: memref<2x128xf32, #tpu.memory_space<vmem>>, %arg10: memref<2x128xf32, #tpu.memory_space<vmem>>) attributes {dimension_semantics = [#tpu.dimension_semantics<parallel>], iteration_bounds = array<i64: 1>, scalar_prefetch = 0 : i64, scratch_operands = 0 : i64, tpu.core_type = #tpu.core_type<tc>, window_params = [{transform_indices = @transform_0, window_bounds = array<i64: 2, 16>}, {transform_indices = @transform_1, window_bounds = array<i64: 2, 24>}, {transform_indices = @transform_2, window_bounds = array<i64: 2, 32, 32>}, {pipeline_mode = #tpu.pipeline_mode<synchronous>, transform_indices = @transform_3, window_bounds = array<i64: 3, 32, 16>}, {pipeline_mode = #tpu.pipeline_mode<synchronous>, transform_indices = @transform_4, window_bounds = array<i64: 3, 24, 16>}, {pipeline_mode = #tpu.pipeline_mode<synchronous>, transform_indices = @transform_5, window_bounds = array<i64: 3, 1, 16>}, {pipeline_mode = #tpu.pipeline_mode<synchronous>, transform_indices = @transform_6, window_bounds = array<i64: 3, 16, 1>}, {pipeline_mode = #tpu.pipeline_mode<synchronous>, transform_indices = @transform_7, window_bounds = array<i64: 3, 1, 1>}, {transform_indices = @transform_8, window_bounds = array<i64: 2, 128>}, {transform_indices = @transform_9, window_bounds = array<i64: 2, 128>}]} {
    %c0 = arith.constant 0 : index
    %c0_0 = arith.constant 0 : index
    %0 = vector.load %arg1[%c0, %c0_0] : memref<2x16xf32, #tpu.memory_space<vmem>>, vector<2x16xf32>
    %c0_1 = arith.constant 0 : index
    %c0_2 = arith.constant 0 : index
    %1 = vector.load %arg2[%c0_1, %c0_2] : memref<2x24xf32, #tpu.memory_space<vmem>>, vector<2x24xf32>
    %c0_3 = arith.constant 0 : index
    %c0_4 = arith.constant 0 : index
    %c0_5 = arith.constant 0 : index
    %2 = vector.load %arg5[%c0_3, %c0_4, %c0_5] : memref<3x24x16xf32, #tpu.memory_space<vmem>>, vector<1x24x16xf32>
    %3 = vector.shape_cast %2 : vector<1x24x16xf32> to vector<24x16xf32>
    %cst = arith.constant dense<0.000000e+00> : vector<2x16xf32>
    %4 = tpu.matmul %1, %3, %cst {dimension_numbers = #tpu.dot_dimension_numbers<[1], [0], [0], [1], [0, 0, 1, 1], [], []>} : vector<2x24xf32>, vector<24x16xf32>, vector<2x16xf32> -> vector<2x16xf32>
    %c0_6 = arith.constant 0 : index
    %c0_7 = arith.constant 0 : index
    %c0_8 = arith.constant 0 : index
    %5 = vector.load %arg6[%c0_6, %c0_7, %c0_8] : memref<3x1x16xf32, #tpu.memory_space<vmem>>, vector<1x1x16xf32>
    %6 = vector.shape_cast %5 : vector<1x1x16xf32> to vector<1x16xf32>
    %7 = vector.broadcast %6 : vector<1x16xf32> to vector<2x16xf32>
    %8 = arith.addf %4, %7 : vector<2x16xf32>
    %c1 = arith.constant 1 : index
    %c0_9 = arith.constant 0 : index
    %c0_10 = arith.constant 0 : index
    %9 = vector.load %arg5[%c1, %c0_9, %c0_10] : memref<3x24x16xf32, #tpu.memory_space<vmem>>, vector<1x24x16xf32>
    %10 = vector.shape_cast %9 : vector<1x24x16xf32> to vector<24x16xf32>
    %cst_11 = arith.constant dense<0.000000e+00> : vector<2x16xf32>
    %11 = tpu.matmul %1, %10, %cst_11 {dimension_numbers = #tpu.dot_dimension_numbers<[1], [0], [0], [1], [0, 0, 1, 1], [], []>} : vector<2x24xf32>, vector<24x16xf32>, vector<2x16xf32> -> vector<2x16xf32>
    %c1_12 = arith.constant 1 : index
    %c0_13 = arith.constant 0 : index
    %c0_14 = arith.constant 0 : index
    %12 = vector.load %arg6[%c1_12, %c0_13, %c0_14] : memref<3x1x16xf32, #tpu.memory_space<vmem>>, vector<1x1x16xf32>
    %13 = vector.shape_cast %12 : vector<1x1x16xf32> to vector<1x16xf32>
    %14 = vector.broadcast %13 : vector<1x16xf32> to vector<2x16xf32>
    %15 = arith.addf %11, %14 : vector<2x16xf32>
    %c2 = arith.constant 2 : index
    %c0_15 = arith.constant 0 : index
    %c0_16 = arith.constant 0 : index
    %16 = vector.load %arg5[%c2, %c0_15, %c0_16] : memref<3x24x16xf32, #tpu.memory_space<vmem>>, vector<1x24x16xf32>
    %17 = vector.shape_cast %16 : vector<1x24x16xf32> to vector<24x16xf32>
    %cst_17 = arith.constant dense<0.000000e+00> : vector<2x16xf32>
    %18 = tpu.matmul %1, %17, %cst_17 {dimension_numbers = #tpu.dot_dimension_numbers<[1], [0], [0], [1], [0, 0, 1, 1], [], []>} : vector<2x24xf32>, vector<24x16xf32>, vector<2x16xf32> -> vector<2x16xf32>
    %c2_18 = arith.constant 2 : index
    %c0_19 = arith.constant 0 : index
    %c0_20 = arith.constant 0 : index
    %19 = vector.load %arg6[%c2_18, %c0_19, %c0_20] : memref<3x1x16xf32, #tpu.memory_space<vmem>>, vector<1x1x16xf32>
    %20 = vector.shape_cast %19 : vector<1x1x16xf32> to vector<1x16xf32>
    %21 = vector.broadcast %20 : vector<1x16xf32> to vector<2x16xf32>
    %22 = arith.addf %18, %21 : vector<2x16xf32>
    %23 = math.cos %0 : vector<2x16xf32>
    %cst_21 = arith.constant 1.000000e+00 : f32
    %24 = vector.broadcast %cst_21 : f32 to vector<2x16xf32>
    %25 = arith.mulf %24, %23 : vector<2x16xf32>
    %26 = math.sin %0 : vector<2x16xf32>
    %cst_22 = arith.constant 1.000000e+00 : f32
    %27 = vector.broadcast %cst_22 : f32 to vector<2x16xf32>
    %28 = arith.mulf %27, %26 : vector<2x16xf32>
    %29 = tpu.concatenate %25, %28 in 1 : vector<2x16xf32>, vector<2x16xf32> -> vector<2x32xf32>
    %30 = vector.extract_strided_slice %29 {offsets = [0, 0], sizes = [1, 32], strides = [1, 1]} : vector<2x32xf32> to vector<1x32xf32>
    %c0_23 = arith.constant 0 : index
    %c0_24 = arith.constant 0 : index
    %c0_25 = arith.constant 0 : index
    %31 = vector.load %arg3[%c0_23, %c0_24, %c0_25] : memref<2x32x32xf32, #tpu.memory_space<vmem>>, vector<1x32x32xf32>
    %32 = vector.shape_cast %31 : vector<1x32x32xf32> to vector<32x32xf32>
    %cst_26 = arith.constant dense<0.000000e+00> : vector<1x32xf32>
    %33 = tpu.matmul %30, %32, %cst_26 {dimension_numbers = #tpu.dot_dimension_numbers<[1], [0], [0], [1], [0, 0, 1, 1], [], []>} : vector<1x32xf32>, vector<32x32xf32>, vector<1x32xf32> -> vector<1x32xf32>
    %34 = vector.extract_strided_slice %29 {offsets = [1, 0], sizes = [1, 32], strides = [1, 1]} : vector<2x32xf32> to vector<1x32xf32>
    %c1_27 = arith.constant 1 : index
    %c0_28 = arith.constant 0 : index
    %c0_29 = arith.constant 0 : index
    %35 = vector.load %arg3[%c1_27, %c0_28, %c0_29] : memref<2x32x32xf32, #tpu.memory_space<vmem>>, vector<1x32x32xf32>
    %36 = vector.shape_cast %35 : vector<1x32x32xf32> to vector<32x32xf32>
    %cst_30 = arith.constant dense<0.000000e+00> : vector<1x32xf32>
    %37 = tpu.matmul %34, %36, %cst_30 {dimension_numbers = #tpu.dot_dimension_numbers<[1], [0], [0], [1], [0, 0, 1, 1], [], []>} : vector<1x32xf32>, vector<32x32xf32>, vector<1x32xf32> -> vector<1x32xf32>
    %38 = tpu.concatenate %33, %37 in 0 : vector<1x32xf32>, vector<1x32xf32> -> vector<2x32xf32>
    %39 = vector.extract_strided_slice %38 {offsets = [0, 0], sizes = [2, 16], strides = [1, 1]} : vector<2x32xf32> to vector<2x16xf32>
    %40 = vector.extract_strided_slice %38 {offsets = [0, 16], sizes = [2, 16], strides = [1, 1]} : vector<2x32xf32> to vector<2x16xf32>
    %41 = arith.mulf %25, %40 : vector<2x16xf32>
    %42 = arith.mulf %28, %39 : vector<2x16xf32>
    %43 = arith.subf %41, %42 : vector<2x16xf32>
    %cst_31 = arith.constant 2.000000e+00 : f32
    %44 = vector.broadcast %cst_31 : f32 to vector<2x16xf32>
    %45 = arith.mulf %44, %43 : vector<2x16xf32>
    %c0_32 = arith.constant 0 : index
    %c0_33 = arith.constant 0 : index
    %c0_34 = arith.constant 0 : index
    %46 = vector.load %arg4[%c0_32, %c0_33, %c0_34] : memref<3x32x16xf32, #tpu.memory_space<vmem>>, vector<1x32x16xf32>
    %47 = vector.shape_cast %46 : vector<1x32x16xf32> to vector<32x16xf32>
    %cst_35 = arith.constant dense<0.000000e+00> : vector<2x16xf32>
    %48 = tpu.matmul %29, %47, %cst_35 {dimension_numbers = #tpu.dot_dimension_numbers<[1], [0], [0], [1], [0, 0, 1, 1], [], []>} : vector<2x32xf32>, vector<32x16xf32>, vector<2x16xf32> -> vector<2x16xf32>
    %49 = arith.addf %48, %8 : vector<2x16xf32>
    %cst_36 = arith.constant 0.000000e+00 : f32
    %50 = vector.broadcast %cst_36 : f32 to vector<2x16xf32>
    %51 = arith.maximumf %49, %50 : vector<2x16xf32>
    %c0_37 = arith.constant 0 : index
    %c0_38 = arith.constant 0 : index
    %c0_39 = arith.constant 0 : index
    %52 = vector.load %arg7[%c0_37, %c0_38, %c0_39] : memref<3x16x1xf32, #tpu.memory_space<vmem>>, vector<1x16x1xf32>
    %53 = vector.shape_cast %52 : vector<1x16x1xf32> to vector<16x1xf32>
    %cst_40 = arith.constant dense<0.000000e+00> : vector<2x1xf32>
    %54 = tpu.matmul %51, %53, %cst_40 {dimension_numbers = #tpu.dot_dimension_numbers<[1], [0], [0], [1], [0, 0, 1, 1], [], []>} : vector<2x16xf32>, vector<16x1xf32>, vector<2x1xf32> -> vector<2x1xf32>
    %c0_41 = arith.constant 0 : index
    %c0_42 = arith.constant 0 : index
    %c0_43 = arith.constant 0 : index
    %55 = vector.load %arg8[%c0_41, %c0_42, %c0_43] : memref<3x1x1xf32, #tpu.memory_space<vmem>>, vector<1x1x1xf32>
    %56 = vector.shape_cast %55 : vector<1x1x1xf32> to vector<1x1xf32>
    %57 = vector.broadcast %56 : vector<1x1xf32> to vector<2x1xf32>
    %58 = arith.addf %54, %57 : vector<2x1xf32>
    %cst_44 = arith.constant 0.000000e+00 : f32
    %59 = vector.broadcast %cst_44 : f32 to vector<2x1xf32>
    %60 = arith.subf %59, %58 : vector<2x1xf32>
    %61 = math.exp %60 : vector<2x1xf32>
    %cst_45 = arith.constant 1.000000e+00 : f32
    %62 = vector.broadcast %cst_45 : f32 to vector<2x1xf32>
    %63 = arith.addf %62, %61 : vector<2x1xf32>
    %cst_46 = arith.constant 1.000000e+00 : f32
    %64 = vector.broadcast %cst_46 : f32 to vector<2x1xf32>
    %65 = arith.divf %64, %63 : vector<2x1xf32>
    %66 = vector.broadcast %65 : vector<2x1xf32> to vector<2x16xf32>
    %67 = arith.mulf %66, %45 : vector<2x16xf32>
    %68 = arith.subf %0, %67 : vector<2x16xf32>
    %69 = math.cos %68 : vector<2x16xf32>
    %cst_47 = arith.constant 1.000000e+00 : f32
    %70 = vector.broadcast %cst_47 : f32 to vector<2x16xf32>
    %71 = arith.mulf %70, %69 : vector<2x16xf32>
    %72 = math.sin %68 : vector<2x16xf32>
    %cst_48 = arith.constant 1.000000e+00 : f32
    %73 = vector.broadcast %cst_48 : f32 to vector<2x16xf32>
    %74 = arith.mulf %73, %72 : vector<2x16xf32>
    %75 = tpu.concatenate %71, %74 in 1 : vector<2x16xf32>, vector<2x16xf32> -> vector<2x32xf32>
    %76 = vector.extract_strided_slice %75 {offsets = [0, 0], sizes = [1, 32], strides = [1, 1]} : vector<2x32xf32> to vector<1x32xf32>
    %c0_49 = arith.constant 0 : index
    %c0_50 = arith.constant 0 : index
    %c0_51 = arith.constant 0 : index
    %77 = vector.load %arg3[%c0_49, %c0_50, %c0_51] : memref<2x32x32xf32, #tpu.memory_space<vmem>>, vector<1x32x32xf32>
    %78 = vector.shape_cast %77 : vector<1x32x32xf32> to vector<32x32xf32>
    %cst_52 = arith.constant dense<0.000000e+00> : vector<1x32xf32>
    %79 = tpu.matmul %76, %78, %cst_52 {dimension_numbers = #tpu.dot_dimension_numbers<[1], [0], [0], [1], [0, 0, 1, 1], [], []>} : vector<1x32xf32>, vector<32x32xf32>, vector<1x32xf32> -> vector<1x32xf32>
    %80 = vector.extract_strided_slice %75 {offsets = [1, 0], sizes = [1, 32], strides = [1, 1]} : vector<2x32xf32> to vector<1x32xf32>
    %c1_53 = arith.constant 1 : index
    %c0_54 = arith.constant 0 : index
    %c0_55 = arith.constant 0 : index
    %81 = vector.load %arg3[%c1_53, %c0_54, %c0_55] : memref<2x32x32xf32, #tpu.memory_space<vmem>>, vector<1x32x32xf32>
    %82 = vector.shape_cast %81 : vector<1x32x32xf32> to vector<32x32xf32>
    %cst_56 = arith.constant dense<0.000000e+00> : vector<1x32xf32>
    %83 = tpu.matmul %80, %82, %cst_56 {dimension_numbers = #tpu.dot_dimension_numbers<[1], [0], [0], [1], [0, 0, 1, 1], [], []>} : vector<1x32xf32>, vector<32x32xf32>, vector<1x32xf32> -> vector<1x32xf32>
    %84 = tpu.concatenate %79, %83 in 0 : vector<1x32xf32>, vector<1x32xf32> -> vector<2x32xf32>
    %85 = vector.extract_strided_slice %84 {offsets = [0, 0], sizes = [2, 16], strides = [1, 1]} : vector<2x32xf32> to vector<2x16xf32>
    %86 = vector.extract_strided_slice %84 {offsets = [0, 16], sizes = [2, 16], strides = [1, 1]} : vector<2x32xf32> to vector<2x16xf32>
    %87 = arith.mulf %71, %86 : vector<2x16xf32>
    %88 = arith.mulf %74, %85 : vector<2x16xf32>
    %89 = arith.subf %87, %88 : vector<2x16xf32>
    %cst_57 = arith.constant 2.000000e+00 : f32
    %90 = vector.broadcast %cst_57 : f32 to vector<2x16xf32>
    %91 = arith.mulf %90, %89 : vector<2x16xf32>
    %c1_58 = arith.constant 1 : index
    %c0_59 = arith.constant 0 : index
    %c0_60 = arith.constant 0 : index
    %92 = vector.load %arg4[%c1_58, %c0_59, %c0_60] : memref<3x32x16xf32, #tpu.memory_space<vmem>>, vector<1x32x16xf32>
    %93 = vector.shape_cast %92 : vector<1x32x16xf32> to vector<32x16xf32>
    %cst_61 = arith.constant dense<0.000000e+00> : vector<2x16xf32>
    %94 = tpu.matmul %75, %93, %cst_61 {dimension_numbers = #tpu.dot_dimension_numbers<[1], [0], [0], [1], [0, 0, 1, 1], [], []>} : vector<2x32xf32>, vector<32x16xf32>, vector<2x16xf32> -> vector<2x16xf32>
    %95 = arith.addf %94, %15 : vector<2x16xf32>
    %cst_62 = arith.constant 0.000000e+00 : f32
    %96 = vector.broadcast %cst_62 : f32 to vector<2x16xf32>
    %97 = arith.maximumf %95, %96 : vector<2x16xf32>
    %c1_63 = arith.constant 1 : index
    %c0_64 = arith.constant 0 : index
    %c0_65 = arith.constant 0 : index
    %98 = vector.load %arg7[%c1_63, %c0_64, %c0_65] : memref<3x16x1xf32, #tpu.memory_space<vmem>>, vector<1x16x1xf32>
    %99 = vector.shape_cast %98 : vector<1x16x1xf32> to vector<16x1xf32>
    %cst_66 = arith.constant dense<0.000000e+00> : vector<2x1xf32>
    %100 = tpu.matmul %97, %99, %cst_66 {dimension_numbers = #tpu.dot_dimension_numbers<[1], [0], [0], [1], [0, 0, 1, 1], [], []>} : vector<2x16xf32>, vector<16x1xf32>, vector<2x1xf32> -> vector<2x1xf32>
    %c1_67 = arith.constant 1 : index
    %c0_68 = arith.constant 0 : index
    %c0_69 = arith.constant 0 : index
    %101 = vector.load %arg8[%c1_67, %c0_68, %c0_69] : memref<3x1x1xf32, #tpu.memory_space<vmem>>, vector<1x1x1xf32>
    %102 = vector.shape_cast %101 : vector<1x1x1xf32> to vector<1x1xf32>
    %103 = vector.broadcast %102 : vector<1x1xf32> to vector<2x1xf32>
    %104 = arith.addf %100, %103 : vector<2x1xf32>
    %cst_70 = arith.constant 0.000000e+00 : f32
    %105 = vector.broadcast %cst_70 : f32 to vector<2x1xf32>
    %106 = arith.subf %105, %104 : vector<2x1xf32>
    %107 = math.exp %106 : vector<2x1xf32>
    %cst_71 = arith.constant 1.000000e+00 : f32
    %108 = vector.broadcast %cst_71 : f32 to vector<2x1xf32>
    %109 = arith.addf %108, %107 : vector<2x1xf32>
    %cst_72 = arith.constant 1.000000e+00 : f32
    %110 = vector.broadcast %cst_72 : f32 to vector<2x1xf32>
    %111 = arith.divf %110, %109 : vector<2x1xf32>
    %112 = vector.broadcast %111 : vector<2x1xf32> to vector<2x16xf32>
    %113 = arith.mulf %112, %91 : vector<2x16xf32>
    %114 = arith.subf %68, %113 : vector<2x16xf32>
    %115 = math.cos %114 : vector<2x16xf32>
    %cst_73 = arith.constant 1.000000e+00 : f32
    %116 = vector.broadcast %cst_73 : f32 to vector<2x16xf32>
    %117 = arith.mulf %116, %115 : vector<2x16xf32>
    %118 = math.sin %114 : vector<2x16xf32>
    %cst_74 = arith.constant 1.000000e+00 : f32
    %119 = vector.broadcast %cst_74 : f32 to vector<2x16xf32>
    %120 = arith.mulf %119, %118 : vector<2x16xf32>
    %121 = tpu.concatenate %117, %120 in 1 : vector<2x16xf32>, vector<2x16xf32> -> vector<2x32xf32>
    %122 = vector.extract_strided_slice %121 {offsets = [0, 0], sizes = [1, 32], strides = [1, 1]} : vector<2x32xf32> to vector<1x32xf32>
    %c0_75 = arith.constant 0 : index
    %c0_76 = arith.constant 0 : index
    %c0_77 = arith.constant 0 : index
    %123 = vector.load %arg3[%c0_75, %c0_76, %c0_77] : memref<2x32x32xf32, #tpu.memory_space<vmem>>, vector<1x32x32xf32>
    %124 = vector.shape_cast %123 : vector<1x32x32xf32> to vector<32x32xf32>
    %cst_78 = arith.constant dense<0.000000e+00> : vector<1x32xf32>
    %125 = tpu.matmul %122, %124, %cst_78 {dimension_numbers = #tpu.dot_dimension_numbers<[1], [0], [0], [1], [0, 0, 1, 1], [], []>} : vector<1x32xf32>, vector<32x32xf32>, vector<1x32xf32> -> vector<1x32xf32>
    %126 = vector.extract_strided_slice %121 {offsets = [1, 0], sizes = [1, 32], strides = [1, 1]} : vector<2x32xf32> to vector<1x32xf32>
    %c1_79 = arith.constant 1 : index
    %c0_80 = arith.constant 0 : index
    %c0_81 = arith.constant 0 : index
    %127 = vector.load %arg3[%c1_79, %c0_80, %c0_81] : memref<2x32x32xf32, #tpu.memory_space<vmem>>, vector<1x32x32xf32>
    %128 = vector.shape_cast %127 : vector<1x32x32xf32> to vector<32x32xf32>
    %cst_82 = arith.constant dense<0.000000e+00> : vector<1x32xf32>
    %129 = tpu.matmul %126, %128, %cst_82 {dimension_numbers = #tpu.dot_dimension_numbers<[1], [0], [0], [1], [0, 0, 1, 1], [], []>} : vector<1x32xf32>, vector<32x32xf32>, vector<1x32xf32> -> vector<1x32xf32>
    %130 = tpu.concatenate %125, %129 in 0 : vector<1x32xf32>, vector<1x32xf32> -> vector<2x32xf32>
    %131 = vector.extract_strided_slice %130 {offsets = [0, 0], sizes = [2, 16], strides = [1, 1]} : vector<2x32xf32> to vector<2x16xf32>
    %132 = vector.extract_strided_slice %130 {offsets = [0, 16], sizes = [2, 16], strides = [1, 1]} : vector<2x32xf32> to vector<2x16xf32>
    %133 = arith.mulf %117, %132 : vector<2x16xf32>
    %134 = arith.mulf %120, %131 : vector<2x16xf32>
    %135 = arith.subf %133, %134 : vector<2x16xf32>
    %cst_83 = arith.constant 2.000000e+00 : f32
    %136 = vector.broadcast %cst_83 : f32 to vector<2x16xf32>
    %137 = arith.mulf %136, %135 : vector<2x16xf32>
    %c2_84 = arith.constant 2 : index
    %c0_85 = arith.constant 0 : index
    %c0_86 = arith.constant 0 : index
    %138 = vector.load %arg4[%c2_84, %c0_85, %c0_86] : memref<3x32x16xf32, #tpu.memory_space<vmem>>, vector<1x32x16xf32>
    %139 = vector.shape_cast %138 : vector<1x32x16xf32> to vector<32x16xf32>
    %cst_87 = arith.constant dense<0.000000e+00> : vector<2x16xf32>
    %140 = tpu.matmul %121, %139, %cst_87 {dimension_numbers = #tpu.dot_dimension_numbers<[1], [0], [0], [1], [0, 0, 1, 1], [], []>} : vector<2x32xf32>, vector<32x16xf32>, vector<2x16xf32> -> vector<2x16xf32>
    %141 = arith.addf %140, %22 : vector<2x16xf32>
    %cst_88 = arith.constant 0.000000e+00 : f32
    %142 = vector.broadcast %cst_88 : f32 to vector<2x16xf32>
    %143 = arith.maximumf %141, %142 : vector<2x16xf32>
    %c2_89 = arith.constant 2 : index
    %c0_90 = arith.constant 0 : index
    %c0_91 = arith.constant 0 : index
    %144 = vector.load %arg7[%c2_89, %c0_90, %c0_91] : memref<3x16x1xf32, #tpu.memory_space<vmem>>, vector<1x16x1xf32>
    %145 = vector.shape_cast %144 : vector<1x16x1xf32> to vector<16x1xf32>
    %cst_92 = arith.constant dense<0.000000e+00> : vector<2x1xf32>
    %146 = tpu.matmul %143, %145, %cst_92 {dimension_numbers = #tpu.dot_dimension_numbers<[1], [0], [0], [1], [0, 0, 1, 1], [], []>} : vector<2x16xf32>, vector<16x1xf32>, vector<2x1xf32> -> vector<2x1xf32>
    %c2_93 = arith.constant 2 : index
    %c0_94 = arith.constant 0 : index
    %c0_95 = arith.constant 0 : index
    %147 = vector.load %arg8[%c2_93, %c0_94, %c0_95] : memref<3x1x1xf32, #tpu.memory_space<vmem>>, vector<1x1x1xf32>
    %148 = vector.shape_cast %147 : vector<1x1x1xf32> to vector<1x1xf32>
    %149 = vector.broadcast %148 : vector<1x1xf32> to vector<2x1xf32>
    %150 = arith.addf %146, %149 : vector<2x1xf32>
    %cst_96 = arith.constant 0.000000e+00 : f32
    %151 = vector.broadcast %cst_96 : f32 to vector<2x1xf32>
    %152 = arith.subf %151, %150 : vector<2x1xf32>
    %153 = math.exp %152 : vector<2x1xf32>
    %cst_97 = arith.constant 1.000000e+00 : f32
    %154 = vector.broadcast %cst_97 : f32 to vector<2x1xf32>
    %155 = arith.addf %154, %153 : vector<2x1xf32>
    %cst_98 = arith.constant 1.000000e+00 : f32
    %156 = vector.broadcast %cst_98 : f32 to vector<2x1xf32>
    %157 = arith.divf %156, %155 : vector<2x1xf32>
    %158 = vector.broadcast %157 : vector<2x1xf32> to vector<2x16xf32>
    %159 = arith.mulf %158, %137 : vector<2x16xf32>
    %160 = arith.subf %114, %159 : vector<2x16xf32>
    %161 = math.cos %160 : vector<2x16xf32>
    %cst_99 = arith.constant 1.000000e+00 : f32
    %162 = vector.broadcast %cst_99 : f32 to vector<2x16xf32>
    %163 = arith.mulf %162, %161 : vector<2x16xf32>
    %164 = math.sin %160 : vector<2x16xf32>
    %cst_100 = arith.constant 1.000000e+00 : f32
    %165 = vector.broadcast %cst_100 : f32 to vector<2x16xf32>
    %166 = arith.mulf %165, %164 : vector<2x16xf32>
    %167 = tpu.concatenate %163, %166 in 1 : vector<2x16xf32>, vector<2x16xf32> -> vector<2x32xf32>
    %168 = tpu.concatenate %29, %75, %121, %167 in 1 : vector<2x32xf32>, vector<2x32xf32>, vector<2x32xf32>, vector<2x32xf32> -> vector<2x128xf32>
    %c0_101 = arith.constant 0 : index
    %c0_102 = arith.constant 0 : index
    %169 = vector.load %arg9[%c0_101, %c0_102] : memref<2x128xf32, #tpu.memory_space<vmem>>, vector<2x128xf32>
    tpu.vector_store %arg9[%c0_101, %c0_102], %168 {strides = array<i32>} : memref<2x128xf32, #tpu.memory_space<vmem>>, vector<2x128xf32>,
    %cst_103 = arith.constant 0.000000e+00 : f32
    %170 = vector.broadcast %cst_103 : f32 to vector<2x125xf32>
    %171 = tpu.concatenate %65, %111, %157, %170 in 1 : vector<2x1xf32>, vector<2x1xf32>, vector<2x1xf32>, vector<2x125xf32> -> vector<2x128xf32>
    %c0_104 = arith.constant 0 : index
    %c0_105 = arith.constant 0 : index
    %172 = vector.load %arg10[%c0_104, %c0_105] : memref<2x128xf32, #tpu.memory_space<vmem>>, vector<2x128xf32>
    tpu.vector_store %arg10[%c0_104, %c0_105], %171 {strides = array<i32>} : memref<2x128xf32, #tpu.memory_space<vmem>>, vector<2x128xf32>,
    return
  }
  func.func @transform_0(%arg0: i32) -> (i32, i32) {
    %c0_i32 = arith.constant 0 : i32
    %c0_i32_0 = arith.constant 0 : i32
    return %arg0, %c0_i32 : i32, i32
  }
  func.func @transform_1(%arg0: i32) -> (i32, i32) {
    %c0_i32 = arith.constant 0 : i32
    %c0_i32_0 = arith.constant 0 : i32
    return %arg0, %c0_i32 : i32, i32
  }
  func.func @transform_2(%arg0: i32) -> (i32, i32, i32) {
    %c0_i32 = arith.constant 0 : i32
    %c0_i32_0 = arith.constant 0 : i32
    %c0_i32_1 = arith.constant 0 : i32
    return %arg0, %c0_i32, %c0_i32_0 : i32, i32, i32
  }
  func.func @transform_3(%arg0: i32) -> (i32, i32, i32) {
    %c0_i32 = arith.constant 0 : i32
    %c0_i32_0 = arith.constant 0 : i32
    %c0_i32_1 = arith.constant 0 : i32
    %c0_i32_2 = arith.constant 0 : i32
    return %c0_i32, %c0_i32_0, %c0_i32_1 : i32, i32, i32
  }
  func.func @transform_4(%arg0: i32) -> (i32, i32, i32) {
    %c0_i32 = arith.constant 0 : i32
    %c0_i32_0 = arith.constant 0 : i32
    %c0_i32_1 = arith.constant 0 : i32
    %c0_i32_2 = arith.constant 0 : i32
    return %c0_i32, %c0_i32_0, %c0_i32_1 : i32, i32, i32
  }
  func.func @transform_5(%arg0: i32) -> (i32, i32, i32) {
    %c0_i32 = arith.constant 0 : i32
    %c0_i32_0 = arith.constant 0 : i32
    %c0_i32_1 = arith.constant 0 : i32
    %c0_i32_2 = arith.constant 0 : i32
    return %c0_i32, %c0_i32_0, %c0_i32_1 : i32, i32, i32
  }
  func.func @transform_6(%arg0: i32) -> (i32, i32, i32) {
    %c0_i32 = arith.constant 0 : i32
    %c0_i32_0 = arith.constant 0 : i32
    %c0_i32_1 = arith.constant 0 : i32
    %c0_i32_2 = arith.constant 0 : i32
    return %c0_i32, %c0_i32_0, %c0_i32_1 : i32, i32, i32
  }
  func.func @transform_7(%arg0: i32) -> (i32, i32, i32) {
    %c0_i32 = arith.constant 0 : i32
    %c0_i32_0 = arith.constant 0 : i32
    %c0_i32_1 = arith.constant 0 : i32
    %c0_i32_2 = arith.constant 0 : i32
    return %c0_i32, %c0_i32_0, %c0_i32_1 : i32, i32, i32
  }
  func.func @transform_8(%arg0: i32) -> (i32, i32) {
    %c0_i32 = arith.constant 0 : i32
    %c0_i32_0 = arith.constant 0 : i32
    return %arg0, %c0_i32 : i32, i32
  }
  func.func @transform_9(%arg0: i32) -> (i32, i32) {
    %c0_i32 = arith.constant 0 : i32
    %c0_i32_0 = arith.constant 0 : i32
    return %arg0, %c0_i32 : i32, i32
  }
}

</mosaic_0001>

<llo_original>
// kernel: tpu_custom_call.1
$region0: #{tpu_custom_call.1}
  #allocation0 [shape = 'u32[]', space=smem, size = 0x4, offset = 0x4, fixed_abs, tag = 'smem constant byte address 0x4 - core index']
  #allocation1 [shape = 'u32[144,128]{1,0:T(1,128)}', space=vmem, size = 0x12000, scoped, tag = 'internal scratch']
  %s0 = inlined_call_operand.vmem [shape: f32[2,16], index: 0, kind: input, shape index: {}]
  %s1 = inlined_call_operand.vmem [shape: f32[2,24], index: 1, kind: input, shape index: {}]
  %s2 = inlined_call_operand.vmem [shape: f32[2,32,32], index: 2, kind: input, shape index: {}]
  %s3 = inlined_call_operand.vmem [shape: f32[3,32,16], index: 3, kind: input, shape index: {}]
  %s4 = inlined_call_operand.vmem [shape: f32[3,24,16], index: 4, kind: input, shape index: {}]
  %s5 = inlined_call_operand.vmem [shape: f32[3,1,16], index: 5, kind: input, shape index: {}]
  %s6 = inlined_call_operand.vmem [shape: f32[3,16,1], index: 6, kind: input, shape index: {}]
  %s7 = inlined_call_operand.vmem [shape: f32[3,1,1], index: 7, kind: input, shape index: {}]
  %s8 = inlined_call_operand.hbm [shape: f32[2,128], index: 8, kind: output, shape index: {0}]
  %s9 = inlined_call_operand.hbm [shape: f32[2,128], index: 9, kind: output, shape index: {1}]
  %10 = xla_tuple %s8, %s9
  %s11 = sld [smem:[#allocation0]]
  $region50: #{tpu_custom_call.1} parent=0
    _
  %s13 = ssub.s32 1, %s11
  %s14 = scalar_select 0, %s13, %s11
  $region1: #{tpu_custom_call.1} parent=0
    #allocation2 [shape = 'u8[1024]{0}', space=vmem, size = 0x400, scoped, tag = 'output window, operand 0, single buffered']
    #allocation3 [shape = 's32[1]{0}', space=sflag, size = 0x4, scoped, tag = 'scoped memory for tpu_custom_call.1']
    #allocation4 [shape = 'u8[1024]{0}', space=vmem, size = 0x400, scoped, tag = 'output window, operand 1, single buffered']
    #allocation5 [shape = 's32[1]{0}', space=sflag, size = 0x4, scoped, tag = 'scoped memory for tpu_custom_call.1']
    %15 = vsyncpa [#allocation3], 0
    %16 = vsyncpa [#allocation5], 0
    // Predicated region
    $region2: #{tpu_custom_call.1} parent=1 // pred_check
      _
    $region3: #{tpu_custom_call.1} parent=1 // pred_check_branch
      %18 = sbr.rel (0) target = $region5
    $region4: #{tpu_custom_call.1} parent=1 // pred_region
      _
    $region5: #{tpu_custom_call.1} parent=1 // pred_fallthru
      _
    // Predicated region
    $region6: #{tpu_custom_call.1} parent=1 // pred_check
      _
    $region7: #{tpu_custom_call.1} parent=1 // pred_check_branch
      %20 = sbr.rel (0) target = $region9
    $region8: #{tpu_custom_call.1} parent=1 // pred_region
      _
    $region9: #{tpu_custom_call.1} parent=1 // pred_fallthru
      _
    // Predicated region
    $region10: #{tpu_custom_call.1} parent=1 // pred_check
      _
    $region11: #{tpu_custom_call.1} parent=1 // pred_check_branch
      %22 = sbr.rel (0) target = $region13
    $region12: #{tpu_custom_call.1} parent=1 // pred_region
      _
    $region13: #{tpu_custom_call.1} parent=1 // pred_fallthru
      _
    // Predicated region
    $region14: #{tpu_custom_call.1} parent=1 // pred_check
      _
    $region15: #{tpu_custom_call.1} parent=1 // pred_check_branch
      %24 = sbr.rel (0) target = $region17
    $region16: #{tpu_custom_call.1} parent=1 // pred_region
      _
    $region17: #{tpu_custom_call.1} parent=1 // pred_fallthru
      _
    // Predicated region
    $region18: #{tpu_custom_call.1} parent=1 // pred_check
      _
    $region19: #{tpu_custom_call.1} parent=1 // pred_check_branch
      %26 = sbr.rel (0) target = $region21
    $region20: #{tpu_custom_call.1} parent=1 // pred_region
      _
    $region21: #{tpu_custom_call.1} parent=1 // pred_fallthru
      _
    // Predicated region
    $region22: #{tpu_custom_call.1} parent=1 // pred_check
      _
    $region23: #{tpu_custom_call.1} parent=1 // pred_check_branch
      %28 = sbr.rel (0) target = $region25
    $region24: #{tpu_custom_call.1} parent=1 // pred_region
      _
    $region25: #{tpu_custom_call.1} parent=1 // pred_fallthru
      _
    // Predicated region
    $region26: #{tpu_custom_call.1} parent=1 // pred_check
      _
    $region27: #{tpu_custom_call.1} parent=1 // pred_check_branch
      %30 = sbr.rel (0) target = $region29
    $region28: #{tpu_custom_call.1} parent=1 // pred_region
      _
    $region29: #{tpu_custom_call.1} parent=1 // pred_fallthru
      _
    // Predicated region
    $region30: #{tpu_custom_call.1} parent=1 // pred_check
      _
    $region31: #{tpu_custom_call.1} parent=1 // pred_check_branch
      %32 = sbr.rel (0) target = $region33
    $region32: #{tpu_custom_call.1} parent=1 // pred_region
      _
    $region33: #{tpu_custom_call.1} parent=1 // pred_fallthru
      _
    %v33 = vld [vmem:[%s0] sm:$0x3]
    %v34 = vld [vmem:[%s1] sm:$0x3]
    %v35 = vld [vmem:[%s4] sm:$0xff]
    %v36 = vld [vmem:[%s4 + $0x8] sm:$0xff]
    %v37 = vld [vmem:[%s4 + $0x10] sm:$0xff]
    %v38 = vld [vmem:[%s5] sm:$0x1]
    %v40 = vlaneseq
    %v41 = vshrl.u32 %v40, 7
    %v42 = vsub.s32 0, %v41
    %v43 = vrot.slane %v38, %v42
    %vm45 = vcmask 195584
    %v47 = vsel %vm45, %v34, 0
    %49 = vmatprep.subr.mxu0 0.0
    %50 = vmatpush1.msra.mxu0 0.0
    %51 = vmatprep.subr.mxu0 0.0
    %52 = vmatpush1.msra.mxu0 0.0
    %53 = vmatprep.subr.mxu0 0.0
    %54 = vmatpush1.msra.mxu0 0.0
    %55 = vmatprep.subr.mxu0 0.0
    %56 = vmatpush1.msra.mxu0 0.0
    %57 = vmatprep.subr.mxu0 0.0
    %58 = vmatpush1.msra.mxu0 0.0
    %59 = vmatprep.subr.mxu0 0.0
    %60 = vmatpush1.msra.mxu0 0.0
    %61 = vmatprep.subr.mxu0 0.0
    %62 = vmatpush1.msra.mxu0 0.0
    %63 = vmatprep.subr.mxu0 0.0
    %64 = vmatpush1.msra.mxu0 0.0
    %65 = vmatprep.subr.mxu0 0.0
    %66 = vmatpush1.msra.mxu0 0.0
    %67 = vmatprep.subr.mxu0 0.0
    %68 = vmatpush1.msra.mxu0 0.0
    %69 = vmatprep.subr.mxu0 0.0
    %70 = vmatpush1.msra.mxu0 0.0
    %71 = vmatprep.subr.mxu0 0.0
    %72 = vmatpush1.msra.mxu0 0.0
    %73 = vmatprep.subr.mxu0 0.0
    %74 = vmatpush1.msra.mxu0 0.0
    %75 = vmatprep.subr.mxu0 0.0
    %76 = vmatpush1.msra.mxu0 %v37
    %77 = vmatprep.subr.mxu0 0.0
    %78 = vmatpush1.msra.mxu0 %v36
    %79 = vmatprep.subr.mxu0 0.0
    %80 = vmatpush1.msra.mxu0 %v35
    %81 = vmatprep.subr.mxu0 0.0
    %82 = vmatpush2.msra.mxu0 0.0
    %83 = vmatprep.subr.mxu0 0.0
    %84 = vmatpush2.msra.mxu0 0.0
    %85 = vmatprep.subr.mxu0 0.0
    %86 = vmatpush2.msra.mxu0 0.0
    %87 = vmatprep.subr.mxu0 0.0
    %88 = vmatpush2.msra.mxu0 0.0
    %89 = vmatprep.subr.mxu0 0.0
    %90 = vmatpush2.msra.mxu0 0.0
    %91 = vmatprep.subr.mxu0 0.0
    %92 = vmatpush2.msra.mxu0 0.0
    %93 = vmatprep.subr.mxu0 0.0
    %94 = vmatpush2.msra.mxu0 0.0
    %95 = vmatprep.subr.mxu0 0.0
    %96 = vmatpush2.msra.mxu0 0.0
    %97 = vmatprep.subr.mxu0 0.0
    %98 = vmatpush2.msra.mxu0 0.0
    %99 = vmatprep.subr.mxu0 0.0
    %100 = vmatpush2.msra.mxu0 0.0
    %101 = vmatprep.subr.mxu0 0.0
    %102 = vmatpush2.msra.mxu0 0.0
    %103 = vmatprep.subr.mxu0 0.0
    %104 = vmatpush2.msra.mxu0 0.0
    %105 = vmatprep.subr.mxu0 0.0
    %106 = vmatpush2.msra.mxu0 0.0
    %107 = vmatprep.subr.mxu0 0.0
    %108 = vmatpush2.msra.mxu0 0.0
    %109 = vmatprep.subr.mxu0 0.0
    %110 = vmatpush2.msra.mxu0 0.0
    %111 = vmatprep.subr.mxu0 0.0
    %112 = vmatpush2.msra.mxu0 0.0
    %113 = vmatprep.mubr.f32.mxu0 0.0
    %114 = vmatmul.mubr.f32.gmra.mxu0 %v47
    %v115 = vpop.f32.mrf.mxu0
    %v116 = vadd.f32 %v43, %v115
    %v117 = vpop.f32.mrf.mxu0
    %118 = vdwg.mxu0
    %s119 = scalar_lea.vmem %s4, 24
    %v120 = vld [vmem:[%s119] sm:$0xff]
    %v121 = vld [vmem:[%s119 + $0x8] sm:$0xff]
    %v122 = vld [vmem:[%s119 + $0x10] sm:$0xff]
    %s123 = scalar_lea.vmem %s5, 1
    %v124 = vld [vmem:[%s123] sm:$0x1]
    %v126 = vlaneseq
    %v127 = vshrl.u32 %v126, 7
    %v128 = vsub.s32 0, %v127
    %v129 = vrot.slane %v124, %v128
    %131 = vmatprep.subr.mxu0 0.0
    %132 = vmatpush1.msra.mxu0 0.0
    %133 = vmatprep.subr.mxu0 0.0
    %134 = vmatpush1.msra.mxu0 0.0
    %135 = vmatprep.subr.mxu0 0.0
    %136 = vmatpush1.msra.mxu0 0.0
    %137 = vmatprep.subr.mxu0 0.0
    %138 = vmatpush1.msra.mxu0 0.0
    %139 = vmatprep.subr.mxu0 0.0
    %140 = vmatpush1.msra.mxu0 0.0
    %141 = vmatprep.subr.mxu0 0.0
    %142 = vmatpush1.msra.mxu0 0.0
    %143 = vmatprep.subr.mxu0 0.0
    %144 = vmatpush1.msra.mxu0 0.0
    %145 = vmatprep.subr.mxu0 0.0
    %146 = vmatpush1.msra.mxu0 0.0
    %147 = vmatprep.subr.mxu0 0.0
    %148 = vmatpush1.msra.mxu0 0.0
    %149 = vmatprep.subr.mxu0 0.0
    %150 = vmatpush1.msra.mxu0 0.0
    %151 = vmatprep.subr.mxu0 0.0
    %152 = vmatpush1.msra.mxu0 0.0
    %153 = vmatprep.subr.mxu0 0.0
    %154 = vmatpush1.msra.mxu0 0.0
    %155 = vmatprep.subr.mxu0 0.0
    %156 = vmatpush1.msra.mxu0 0.0
    %157 = vmatprep.subr.mxu0 0.0
    %158 = vmatpush1.msra.mxu0 %v122
    %159 = vmatprep.subr.mxu0 0.0
    %160 = vmatpush1.msra.mxu0 %v121
    %161 = vmatprep.subr.mxu0 0.0
    %162 = vmatpush1.msra.mxu0 %v120
    %163 = vmatprep.subr.mxu0 0.0
    %164 = vmatpush2.msra.mxu0 0.0
    %165 = vmatprep.subr.mxu0 0.0
    %166 = vmatpush2.msra.mxu0 0.0
    %167 = vmatprep.subr.mxu0 0.0
    %168 = vmatpush2.msra.mxu0 0.0
    %169 = vmatprep.subr.mxu0 0.0
    %170 = vmatpush2.msra.mxu0 0.0
    %171 = vmatprep.subr.mxu0 0.0
    %172 = vmatpush2.msra.mxu0 0.0
    %173 = vmatprep.subr.mxu0 0.0
    %174 = vmatpush2.msra.mxu0 0.0
    %175 = vmatprep.subr.mxu0 0.0
    %176 = vmatpush2.msra.mxu0 0.0
    %177 = vmatprep.subr.mxu0 0.0
    %178 = vmatpush2.msra.mxu0 0.0
    %179 = vmatprep.subr.mxu0 0.0
    %180 = vmatpush2.msra.mxu0 0.0
    %181 = vmatprep.subr.mxu0 0.0
    %182 = vmatpush2.msra.mxu0 0.0
    %183 = vmatprep.subr.mxu0 0.0
    %184 = vmatpush2.msra.mxu0 0.0
    %185 = vmatprep.subr.mxu0 0.0
    %186 = vmatpush2.msra.mxu0 0.0
    %187 = vmatprep.subr.mxu0 0.0
    %188 = vmatpush2.msra.mxu0 0.0
    %189 = vmatprep.subr.mxu0 0.0
    %190 = vmatpush2.msra.mxu0 0.0
    %191 = vmatprep.subr.mxu0 0.0
    %192 = vmatpush2.msra.mxu0 0.0
    %193 = vmatprep.subr.mxu0 0.0
    %194 = vmatpush2.msra.mxu0 0.0
    %195 = vmatprep.mubr.f32.mxu0 0.0
    %196 = vmatmul.mubr.f32.gmra.mxu0 %v47
    %v197 = vpop.f32.mrf.mxu0
    %v198 = vadd.f32 %v129, %v197
    %v199 = vpop.f32.mrf.mxu0
    %200 = vdwg.mxu0
    %s201 = scalar_lea.vmem %s4, 48
    %v202 = vld [vmem:[%s201] sm:$0xff]
    %v203 = vld [vmem:[%s201 + $0x8] sm:$0xff]
    %v204 = vld [vmem:[%s201 + $0x10] sm:$0xff]
    %s205 = scalar_lea.vmem %s5, 2
    %v206 = vld [vmem:[%s205] sm:$0x1]
    %v208 = vlaneseq
    %v209 = vshrl.u32 %v208, 7
    %v210 = vsub.s32 0, %v209
    %v211 = vrot.slane %v206, %v210
    %213 = vmatprep.subr.mxu0 0.0
    %214 = vmatpush1.msra.mxu0 0.0
    %215 = vmatprep.subr.mxu0 0.0
    %216 = vmatpush1.msra.mxu0 0.0
    %217 = vmatprep.subr.mxu0 0.0
    %218 = vmatpush1.msra.mxu0 0.0
    %219 = vmatprep.subr.mxu0 0.0
    %220 = vmatpush1.msra.mxu0 0.0
    %221 = vmatprep.subr.mxu0 0.0
    %222 = vmatpush1.msra.mxu0 0.0
    %223 = vmatprep.subr.mxu0 0.0
    %224 = vmatpush1.msra.mxu0 0.0
    %225 = vmatprep.subr.mxu0 0.0
    %226 = vmatpush1.msra.mxu0 0.0
    %227 = vmatprep.subr.mxu0 0.0
    %228 = vmatpush1.msra.mxu0 0.0
    %229 = vmatprep.subr.mxu0 0.0
    %230 = vmatpush1.msra.mxu0 0.0
    %231 = vmatprep.subr.mxu0 0.0
    %232 = vmatpush1.msra.mxu0 0.0
    %233 = vmatprep.subr.mxu0 0.0
    %234 = vmatpush1.msra.mxu0 0.0
    %235 = vmatprep.subr.mxu0 0.0
    %236 = vmatpush1.msra.mxu0 0.0
    %237 = vmatprep.subr.mxu0 0.0
    %238 = vmatpush1.msra.mxu0 0.0
    %239 = vmatprep.subr.mxu0 0.0
    %240 = vmatpush1.msra.mxu0 %v204
    %241 = vmatprep.subr.mxu0 0.0
    %242 = vmatpush1.msra.mxu0 %v203
    %243 = vmatprep.subr.mxu0 0.0
    %244 = vmatpush1.msra.mxu0 %v202
    %245 = vmatprep.subr.mxu0 0.0
    %246 = vmatpush2.msra.mxu0 0.0
    %247 = vmatprep.subr.mxu0 0.0
    %248 = vmatpush2.msra.mxu0 0.0
    %249 = vmatprep.subr.mxu0 0.0
    %250 = vmatpush2.msra.mxu0 0.0
    %251 = vmatprep.subr.mxu0 0.0
    %252 = vmatpush2.msra.mxu0 0.0
    %253 = vmatprep.subr.mxu0 0.0
    %254 = vmatpush2.msra.mxu0 0.0
    %255 = vmatprep.subr.mxu0 0.0
    %256 = vmatpush2.msra.mxu0 0.0
    %257 = vmatprep.subr.mxu0 0.0
    %258 = vmatpush2.msra.mxu0 0.0
    %259 = vmatprep.subr.mxu0 0.0
    %260 = vmatpush2.msra.mxu0 0.0
    %261 = vmatprep.subr.mxu0 0.0
    %262 = vmatpush2.msra.mxu0 0.0
    %263 = vmatprep.subr.mxu0 0.0
    %264 = vmatpush2.msra.mxu0 0.0
    %265 = vmatprep.subr.mxu0 0.0
    %266 = vmatpush2.msra.mxu0 0.0
    %267 = vmatprep.subr.mxu0 0.0
    %268 = vmatpush2.msra.mxu0 0.0
    %269 = vmatprep.subr.mxu0 0.0
    %270 = vmatpush2.msra.mxu0 0.0
    %271 = vmatprep.subr.mxu0 0.0
    %272 = vmatpush2.msra.mxu0 0.0
    %273 = vmatprep.subr.mxu0 0.0
    %274 = vmatpush2.msra.mxu0 0.0
    %275 = vmatprep.subr.mxu0 0.0
    %276 = vmatpush2.msra.mxu0 0.0
    %277 = vmatprep.mubr.f32.mxu0 0.0
    %278 = vmatmul.mubr.f32.gmra.mxu0 %v47
    %v279 = vpop.f32.mrf.mxu0
    %v280 = vadd.f32 %v211, %v279
    %v281 = vpop.f32.mrf.mxu0
    %282 = vdwg.mxu0
    %v283 = vand.u32 2147483647, %v33
    %vm284 = vcmp.le.f32.partialorder %v283, 0.7853982
    %vm285 = vcmp.lt.s32.totalorder %v33, 0
    %v286 = vand.u32 %v33, 2139095040
    %v287 = vshrl.u32 %v286, 23
    %v288 = vsub.s32 %v287, 127
    %v289 = vand.u32 2147483647, %v33
    %v290 = vand.u32 %v289, 8388607
    %v291 = vor.u32 %v290, 8388608
    %v292 = vsub.s32 0, %v291
    %v293 = vadd.s32 %v288, 1
    %vm294 = vcmp.gt.s32.totalorder %v293, 0
    %v295 = vsel %vm294, %v293, 0
    %v296 = vshrl.u32 %v295, 5
    %v297 = vand.u32 %v295, 31
    %v298 = vsub.s32 32, %v297
    %v299 = vshrl.u32 683565275, %v298
    %v300 = vshll.u32 683565275, %v297
    %v301 = vshrl.u32 2475754826, %v298
    %v302 = vor.u32 %v300, %v301
    %v303 = vshll.u32 2475754826, %v297
    %v304 = vshrl.u32 2131351028, %v298
    %v305 = vor.u32 %v303, %v304
    %v306 = vshll.u32 2131351028, %v297
    %v307 = vshrl.u32 2102212464, %v298
    %v308 = vor.u32 %v306, %v307
    %v309 = vshll.u32 2102212464, %v297
    %v310 = vshrl.u32 920167782, %v298
    %v311 = vor.u32 %v309, %v310
    %v312 = vshll.u32 920167782, %v297
    %v313 = vshrl.u32 1326507024, %v298
    %v314 = vor.u32 %v312, %v313
    %vm315 = vcmp.lt.s32.totalorder %v296, 1
    %vm316 = vcmp.lt.s32.totalorder %v296, 2
    %vm317 = vcmp.lt.s32.totalorder %v296, 3
    %vm318 = vcmp.lt.s32.totalorder %v296, 4
    %v319 = vsel %vm315, %v299, %v302
    %v320 = vsel %vm318, %v308, 2102212464
    %v321 = vsel %vm317, %v305, %v320
    %v322 = vsel %vm316, %v319, %v321
    %v323 = vsel %vm315, %v302, %v305
    %v324 = vsel %vm318, %v311, 920167782
    %v325 = vsel %vm317, %v308, %v324
    %v326 = vsel %vm316, %v323, %v325
    %v327 = vsel %vm315, %v305, %v308
    %v328 = vsel %vm318, %v314, 1326507024
    %v329 = vsel %vm317, %v311, %v328
    %v330 = vsel %vm316, %v327, %v329
    %v331 = vshll.u32 %v291, 8
    %v332 = vmul.u32.u64.compose %v331, %v330
    %v333 = vextract.low.u32 %v332
    %v334 = vextract.high.u32 %v332
    %v335 = vmul.u32.u64.compose %v331, %v326
    %v336 = vextract.low.u32 %v335
    %v337 = vextract.high.u32 %v335
    %v338 = vmul.u32 %v331, %v322
    %v339 = vadd.s32 %v334, %v336
    %vm340 = vc.u32 %v334, %v336
    %v341 = vadd.s32 %v337, 1
    %v342 = vsel %vm340, %v341, %v337
    %v343 = vadd.s32 %v338, %v342
    %v344 = vadd.s32 %v343, 536870912
    %v345 = vshrl.u32 %v344, 30
    %v346 = vshll.u32 %v345, 30
    %v347 = vsub.s32 %v343, %v346
    %vm348 = vcmp.lt.s32.totalorder %v347, 0
    %v349 = vsub.s32 0, %v347
    %v350 = vsel %vm348, %v349, %v347
    %v351 = vclz %v350
    %v352 = vsub.s32 %v351, 2
    %vm353 = vcmp.gt.s32.totalorder 0, %v352
    %v354 = vsel %vm353, 0, %v352
    %v355 = vsub.s32 32, %v354
    %v356 = vshll.u32 %v347, %v354
    %v357 = vshrl.u32 %v339, %v355
    %v358 = vor.u32 %v356, %v357
    %v359 = vsub.s32 4294967266, %v354
    %v360 = vadd.s32 %v359, 127
    %v361 = vshll.u32 %v360, 23
    %v362 = vor.u32 4788187, %v361
    %v363 = vand.u32 2147483647, %v362
    %v365 = vcvt.s32.f32 %v358
    %v366 = vmul.f32 %v365, %v363
    %v367 = vxor.u32 %v366, 2147483648
    %v368 = vsel %vm285, %v367, %v366
    %v369 = vsub.s32 4, %v345
    %v370 = vsel %vm285, %v369, %v345
    %v371 = vsel %vm284, %v33, %v368
    %v372 = vsel %vm284, 0, %v370
    %v373 = vcosq.f32.pop %v371
    %v374 = vsinq.f32.pop %v371
    %vm375 = vweird.f32 %v33
    %v376 = vand.u32 %v372, 3
    %vm377 = vcmp.lt.s32.totalorder %v376, 2
    %vm378 = vcmp.eq.s32.totalorder %v376, 0
    %v379 = vxor.u32 %v374, 2147483648
    %v380 = vsel %vm378, %v373, %v379
    %vm381 = vcmp.eq.s32.totalorder %v376, 2
    %v382 = vxor.u32 %v373, 2147483648
    %v383 = vsel %vm381, %v382, %v374
    %v384 = vsel %vm377, %v380, %v383
    %v385 = vsel %vm375, nan, %v384
    %v386 = vand.u32 2147483647, %v33
    %vm387 = vcmp.le.f32.partialorder %v386, 0.7853982
    %vm388 = vcmp.lt.s32.totalorder %v33, 0
    %v389 = vand.u32 %v33, 2139095040
    %v390 = vshrl.u32 %v389, 23
    %v391 = vsub.s32 %v390, 127
    %v392 = vand.u32 2147483647, %v33
    %v393 = vand.u32 %v392, 8388607
    %v394 = vor.u32 %v393, 8388608
    %v395 = vsub.s32 0, %v394
    %v396 = vadd.s32 %v391, 1
    %vm397 = vcmp.gt.s32.totalorder %v396, 0
    %v398 = vsel %vm397, %v396, 0
    %v399 = vshrl.u32 %v398, 5
    %v400 = vand.u32 %v398, 31
    %v401 = vsub.s32 32, %v400
    %v402 = vshrl.u32 683565275, %v401
    %v403 = vshll.u32 683565275, %v400
    %v404 = vshrl.u32 2475754826, %v401
    %v405 = vor.u32 %v403, %v404
    %v406 = vshll.u32 2475754826, %v400
    %v407 = vshrl.u32 2131351028, %v401
    %v408 = vor.u32 %v406, %v407
    %v409 = vshll.u32 2131351028, %v400
    %v410 = vshrl.u32 2102212464, %v401
    %v411 = vor.u32 %v409, %v410
    %v412 = vshll.u32 2102212464, %v400
    %v413 = vshrl.u32 920167782, %v401
    %v414 = vor.u32 %v412, %v413
    %v415 = vshll.u32 920167782, %v400
    %v416 = vshrl.u32 1326507024, %v401
    %v417 = vor.u32 %v415, %v416
    %vm418 = vcmp.lt.s32.totalorder %v399, 1
    %vm419 = vcmp.lt.s32.totalorder %v399, 2
    %vm420 = vcmp.lt.s32.totalorder %v399, 3
    %vm421 = vcmp.lt.s32.totalorder %v399, 4
    %v422 = vsel %vm418, %v402, %v405
    %v423 = vsel %vm421, %v411, 2102212464
    %v424 = vsel %vm420, %v408, %v423
    %v425 = vsel %vm419, %v422, %v424
    %v426 = vsel %vm418, %v405, %v408
    %v427 = vsel %vm421, %v414, 920167782
    %v428 = vsel %vm420, %v411, %v427
    %v429 = vsel %vm419, %v426, %v428
    %v430 = vsel %vm418, %v408, %v411
    %v431 = vsel %vm421, %v417, 1326507024
    %v432 = vsel %vm420, %v414, %v431
    %v433 = vsel %vm419, %v430, %v432
    %v434 = vshll.u32 %v394, 8
    %v435 = vmul.u32.u64.compose %v434, %v433
    %v436 = vextract.low.u32 %v435
    %v437 = vextract.high.u32 %v435
    %v438 = vmul.u32.u64.compose %v434, %v429
    %v439 = vextract.low.u32 %v438
    %v440 = vextract.high.u32 %v438
    %v441 = vmul.u32 %v434, %v425
    %v442 = vadd.s32 %v437, %v439
    %vm443 = vc.u32 %v437, %v439
    %v444 = vadd.s32 %v440, 1
    %v445 = vsel %vm443, %v444, %v440
    %v446 = vadd.s32 %v441, %v445
    %v447 = vadd.s32 %v446, 536870912
    %v448 = vshrl.u32 %v447, 30
    %v449 = vshll.u32 %v448, 30
    %v450 = vsub.s32 %v446, %v449
    %vm451 = vcmp.lt.s32.totalorder %v450, 0
    %v452 = vsub.s32 0, %v450
    %v453 = vsel %vm451, %v452, %v450
    %v454 = vclz %v453
    %v455 = vsub.s32 %v454, 2
    %vm456 = vcmp.gt.s32.totalorder 0, %v455
    %v457 = vsel %vm456, 0, %v455
    %v458 = vsub.s32 32, %v457
    %v459 = vshll.u32 %v450, %v457
    %v460 = vshrl.u32 %v442, %v458
    %v461 = vor.u32 %v459, %v460
    %v462 = vsub.s32 4294967266, %v457
    %v463 = vadd.s32 %v462, 127
    %v464 = vshll.u32 %v463, 23
    %v465 = vor.u32 4788187, %v464
    %v466 = vand.u32 2147483647, %v465
    %v468 = vcvt.s32.f32 %v461
    %v469 = vmul.f32 %v468, %v466
    %v470 = vxor.u32 %v469, 2147483648
    %v471 = vsel %vm388, %v470, %v469
    %v472 = vsub.s32 4, %v448
    %v473 = vsel %vm388, %v472, %v448
    %v474 = vsel %vm387, %v33, %v471
    %v475 = vsel %vm387, 0, %v473
    %v476 = vcosq.f32.pop %v474
    %v477 = vsinq.f32.pop %v474
    %vm478 = vweird.f32 %v33
    %v479 = vadd.s32 %v475, 3
    %v480 = vand.u32 %v479, 3
    %vm481 = vcmp.lt.s32.totalorder %v480, 2
    %vm482 = vcmp.eq.s32.totalorder %v480, 0
    %v483 = vxor.u32 %v477, 2147483648
    %v484 = vsel %vm482, %v476, %v483
    %vm485 = vcmp.eq.s32.totalorder %v480, 2
    %v486 = vxor.u32 %v476, 2147483648
    %v487 = vsel %vm485, %v486, %v477
    %v488 = vsel %vm481, %v484, %v487
    %v489 = vsel %vm478, nan, %v488
    %491 = vrot.lane.b32.xlu0 %v489, 16
    %v492 = vpop.permute.xlu0 %491
    %vm494 = vcmask 130048
    %v495 = vsel %vm494, %v385, %v492
    %v496 = vld [vmem:[%s2] sm:$0xff]
    %v497 = vld [vmem:[%s2 + $0x8] sm:$0xff]
    %v498 = vld [vmem:[%s2 + $0x10] sm:$0xff]
    %v499 = vld [vmem:[%s2 + $0x18] sm:$0xff]
    %vm500 = vcmask 261120
    %v502 = vsel %vm500, %v495, 0
    %504 = vmatprep.subr.mxu0 0.0
    %505 = vmatpush1.msra.mxu0 0.0
    %506 = vmatprep.subr.mxu0 0.0
    %507 = vmatpush1.msra.mxu0 0.0
    %508 = vmatprep.subr.mxu0 0.0
    %509 = vmatpush1.msra.mxu0 0.0
    %510 = vmatprep.subr.mxu0 0.0
    %511 = vmatpush1.msra.mxu0 0.0
    %512 = vmatprep.subr.mxu0 0.0
    %513 = vmatpush1.msra.mxu0 0.0
    %514 = vmatprep.subr.mxu0 0.0
    %515 = vmatpush1.msra.mxu0 0.0
    %516 = vmatprep.subr.mxu0 0.0
    %517 = vmatpush1.msra.mxu0 0.0
    %518 = vmatprep.subr.mxu0 0.0
    %519 = vmatpush1.msra.mxu0 0.0
    %520 = vmatprep.subr.mxu0 0.0
    %521 = vmatpush1.msra.mxu0 0.0
    %522 = vmatprep.subr.mxu0 0.0
    %523 = vmatpush1.msra.mxu0 0.0
    %524 = vmatprep.subr.mxu0 0.0
    %525 = vmatpush1.msra.mxu0 0.0
    %526 = vmatprep.subr.mxu0 0.0
    %527 = vmatpush1.msra.mxu0 0.0
    %528 = vmatprep.subr.mxu0 0.0
    %529 = vmatpush1.msra.mxu0 %v499
    %530 = vmatprep.subr.mxu0 0.0
    %531 = vmatpush1.msra.mxu0 %v498
    %532 = vmatprep.subr.mxu0 0.0
    %533 = vmatpush1.msra.mxu0 %v497
    %534 = vmatprep.subr.mxu0 0.0
    %535 = vmatpush1.msra.mxu0 %v496
    %536 = vmatprep.subr.mxu0 0.0
    %537 = vmatpush2.msra.mxu0 0.0
    %538 = vmatprep.subr.mxu0 0.0
    %539 = vmatpush2.msra.mxu0 0.0
    %540 = vmatprep.subr.mxu0 0.0
    %541 = vmatpush2.msra.mxu0 0.0
    %542 = vmatprep.subr.mxu0 0.0
    %543 = vmatpush2.msra.mxu0 0.0
    %544 = vmatprep.subr.mxu0 0.0
    %545 = vmatpush2.msra.mxu0 0.0
    %546 = vmatprep.subr.mxu0 0.0
    %547 = vmatpush2.msra.mxu0 0.0
    %548 = vmatprep.subr.mxu0 0.0
    %549 = vmatpush2.msra.mxu0 0.0
    %550 = vmatprep.subr.mxu0 0.0
    %551 = vmatpush2.msra.mxu0 0.0
    %552 = vmatprep.subr.mxu0 0.0
    %553 = vmatpush2.msra.mxu0 0.0
    %554 = vmatprep.subr.mxu0 0.0
    %555 = vmatpush2.msra.mxu0 0.0
    %556 = vmatprep.subr.mxu0 0.0
    %557 = vmatpush2.msra.mxu0 0.0
    %558 = vmatprep.subr.mxu0 0.0
    %559 = vmatpush2.msra.mxu0 0.0
    %560 = vmatprep.subr.mxu0 0.0
    %561 = vmatpush2.msra.mxu0 0.0
    %562 = vmatprep.subr.mxu0 0.0
    %563 = vmatpush2.msra.mxu0 0.0
    %564 = vmatprep.subr.mxu0 0.0
    %565 = vmatpush2.msra.mxu0 0.0
    %566 = vmatprep.subr.mxu0 0.0
    %567 = vmatpush2.msra.mxu0 0.0
    %568 = vmatprep.mubr.f32.mxu0 0.0
    %569 = vmatmul.mubr.f32.gmra.mxu0 %v502
    %v570 = vpop.f32.mrf.mxu0
    %v571 = vadd.f32 0.0, %v570
    %v572 = vpop.f32.mrf.mxu0
    %573 = vdwg.mxu0
    %s574 = scalar_lea.vmem %s2, 32
    %v575 = vld [vmem:[%s574] sm:$0xff]
    %v576 = vld [vmem:[%s574 + $0x8] sm:$0xff]
    %v577 = vld [vmem:[%s574 + $0x10] sm:$0xff]
    %v578 = vld [vmem:[%s574 + $0x18] sm:$0xff]
    %v579 = vrot.slane %v495, 1
    %v580 = vsel %vm500, %v579, 0
    %582 = vmatprep.subr.mxu0 0.0
    %583 = vmatpush1.msra.mxu0 0.0
    %584 = vmatprep.subr.mxu0 0.0
    %585 = vmatpush1.msra.mxu0 0.0
    %586 = vmatprep.subr.mxu0 0.0
    %587 = vmatpush1.msra.mxu0 0.0
    %588 = vmatprep.subr.mxu0 0.0
    %589 = vmatpush1.msra.mxu0 0.0
    %590 = vmatprep.subr.mxu0 0.0
    %591 = vmatpush1.msra.mxu0 0.0
    %592 = vmatprep.subr.mxu0 0.0
    %593 = vmatpush1.msra.mxu0 0.0
    %594 = vmatprep.subr.mxu0 0.0
    %595 = vmatpush1.msra.mxu0 0.0
    %596 = vmatprep.subr.mxu0 0.0
    %597 = vmatpush1.msra.mxu0 0.0
    %598 = vmatprep.subr.mxu0 0.0
    %599 = vmatpush1.msra.mxu0 0.0
    %600 = vmatprep.subr.mxu0 0.0
    %601 = vmatpush1.msra.mxu0 0.0
    %602 = vmatprep.subr.mxu0 0.0
    %603 = vmatpush1.msra.mxu0 0.0
    %604 = vmatprep.subr.mxu0 0.0
    %605 = vmatpush1.msra.mxu0 0.0
    %606 = vmatprep.subr.mxu0 0.0
    %607 = vmatpush1.msra.mxu0 %v578
    %608 = vmatprep.subr.mxu0 0.0
    %609 = vmatpush1.msra.mxu0 %v577
    %610 = vmatprep.subr.mxu0 0.0
    %611 = vmatpush1.msra.mxu0 %v576
    %612 = vmatprep.subr.mxu0 0.0
    %613 = vmatpush1.msra.mxu0 %v575
    %614 = vmatprep.subr.mxu0 0.0
    %615 = vmatpush2.msra.mxu0 0.0
    %616 = vmatprep.subr.mxu0 0.0
    %617 = vmatpush2.msra.mxu0 0.0
    %618 = vmatprep.subr.mxu0 0.0
    %619 = vmatpush2.msra.mxu0 0.0
    %620 = vmatprep.subr.mxu0 0.0
    %621 = vmatpush2.msra.mxu0 0.0
    %622 = vmatprep.subr.mxu0 0.0
    %623 = vmatpush2.msra.mxu0 0.0
    %624 = vmatprep.subr.mxu0 0.0
    %625 = vmatpush2.msra.mxu0 0.0
    %626 = vmatprep.subr.mxu0 0.0
    %627 = vmatpush2.msra.mxu0 0.0
    %628 = vmatprep.subr.mxu0 0.0
    %629 = vmatpush2.msra.mxu0 0.0
    %630 = vmatprep.subr.mxu0 0.0
    %631 = vmatpush2.msra.mxu0 0.0
    %632 = vmatprep.subr.mxu0 0.0
    %633 = vmatpush2.msra.mxu0 0.0
    %634 = vmatprep.subr.mxu0 0.0
    %635 = vmatpush2.msra.mxu0 0.0
    %636 = vmatprep.subr.mxu0 0.0
    %637 = vmatpush2.msra.mxu0 0.0
    %638 = vmatprep.subr.mxu0 0.0
    %639 = vmatpush2.msra.mxu0 0.0
    %640 = vmatprep.subr.mxu0 0.0
    %641 = vmatpush2.msra.mxu0 0.0
    %642 = vmatprep.subr.mxu0 0.0
    %643 = vmatpush2.msra.mxu0 0.0
    %644 = vmatprep.subr.mxu0 0.0
    %645 = vmatpush2.msra.mxu0 0.0
    %646 = vmatprep.mubr.f32.mxu0 0.0
    %647 = vmatmul.mubr.f32.gmra.mxu0 %v580
    %v648 = vpop.f32.mrf.mxu0
    %v649 = vadd.f32 0.0, %v648
    %v650 = vpop.f32.mrf.mxu0
    %651 = vdwg.mxu0
    %v653 = vrot.slane %v649, 7
    %vm655 = vcmask 1040384
    %v656 = vsel %vm655, %v571, %v653
    %658 = vrot.lane.b32.xlu0 %v656, 112
    %v659 = vpop.permute.xlu0 %658
    %v661 = vmul.f32 %v385, %v659
    %v662 = vmul.f32 %v489, %v656
    %v663 = vsub.f32 %v661, %v662
    %v664 = vmul.f32 %v663, 2.0
    %v665 = vld [vmem:[%s3] sm:$0xff]
    %v666 = vld [vmem:[%s3 + $0x8] sm:$0xff]
    %v667 = vld [vmem:[%s3 + $0x10] sm:$0xff]
    %v668 = vld [vmem:[%s3 + $0x18] sm:$0xff]
    %669 = vmatprep.subr.mxu0 0.0
    %670 = vmatpush1.msra.mxu0 0.0
    %671 = vmatprep.subr.mxu0 0.0
    %672 = vmatpush1.msra.mxu0 0.0
    %673 = vmatprep.subr.mxu0 0.0
    %674 = vmatpush1.msra.mxu0 0.0
    %675 = vmatprep.subr.mxu0 0.0
    %676 = vmatpush1.msra.mxu0 0.0
    %677 = vmatprep.subr.mxu0 0.0
    %678 = vmatpush1.msra.mxu0 0.0
    %679 = vmatprep.subr.mxu0 0.0
    %680 = vmatpush1.msra.mxu0 0.0
    %681 = vmatprep.subr.mxu0 0.0
    %682 = vmatpush1.msra.mxu0 0.0
    %683 = vmatprep.subr.mxu0 0.0
    %684 = vmatpush1.msra.mxu0 0.0
    %685 = vmatprep.subr.mxu0 0.0
    %686 = vmatpush1.msra.mxu0 0.0
    %687 = vmatprep.subr.mxu0 0.0
    %688 = vmatpush1.msra.mxu0 0.0
    %689 = vmatprep.subr.mxu0 0.0
    %690 = vmatpush1.msra.mxu0 0.0
    %691 = vmatprep.subr.mxu0 0.0
    %692 = vmatpush1.msra.mxu0 0.0
    %693 = vmatprep.subr.mxu0 0.0
    %694 = vmatpush1.msra.mxu0 %v668
    %695 = vmatprep.subr.mxu0 0.0
    %696 = vmatpush1.msra.mxu0 %v667
    %697 = vmatprep.subr.mxu0 0.0
    %698 = vmatpush1.msra.mxu0 %v666
    %699 = vmatprep.subr.mxu0 0.0
    %700 = vmatpush1.msra.mxu0 %v665
    %701 = vmatprep.subr.mxu0 0.0
    %702 = vmatpush2.msra.mxu0 0.0
    %703 = vmatprep.subr.mxu0 0.0
    %704 = vmatpush2.msra.mxu0 0.0
    %705 = vmatprep.subr.mxu0 0.0
    %706 = vmatpush2.msra.mxu0 0.0
    %707 = vmatprep.subr.mxu0 0.0
    %708 = vmatpush2.msra.mxu0 0.0
    %709 = vmatprep.subr.mxu0 0.0
    %710 = vmatpush2.msra.mxu0 0.0
    %711 = vmatprep.subr.mxu0 0.0
    %712 = vmatpush2.msra.mxu0 0.0
    %713 = vmatprep.subr.mxu0 0.0
    %714 = vmatpush2.msra.mxu0 0.0
    %715 = vmatprep.subr.mxu0 0.0
    %716 = vmatpush2.msra.mxu0 0.0
    %717 = vmatprep.subr.mxu0 0.0
    %718 = vmatpush2.msra.mxu0 0.0
    %719 = vmatprep.subr.mxu0 0.0
    %720 = vmatpush2.msra.mxu0 0.0
    %721 = vmatprep.subr.mxu0 0.0
    %722 = vmatpush2.msra.mxu0 0.0
    %723 = vmatprep.subr.mxu0 0.0
    %724 = vmatpush2.msra.mxu0 0.0
    %725 = vmatprep.subr.mxu0 0.0
    %726 = vmatpush2.msra.mxu0 0.0
    %727 = vmatprep.subr.mxu0 0.0
    %728 = vmatpush2.msra.mxu0 0.0
    %729 = vmatprep.subr.mxu0 0.0
    %730 = vmatpush2.msra.mxu0 0.0
    %731 = vmatprep.subr.mxu0 0.0
    %732 = vmatpush2.msra.mxu0 0.0
    %733 = vmatprep.mubr.f32.mxu0 0.0
    %734 = vmatmul.mubr.f32.gmra.mxu0 %v502
    %v735 = vpop.f32.mrf.mxu0
    %v736 = vadd.f32 %v116, %v735
    %v737 = vpop.f32.mrf.mxu0
    %738 = vdwg.mxu0
    %v739 = vmax.f32 %v736, 0.0
    %v740 = vld [vmem:[%s6] sm:$0xff]
    %v741 = vld [vmem:[%s6 + $0x8] sm:$0xff]
    %v742 = vld [vmem:[%s7] sm:$0x1]
    %v744 = vlaneseq
    %v745 = vshrl.u32 %v744, 7
    %v746 = vsub.s32 0, %v745
    %v747 = vrot.slane %v742, %v746
    %v750 = vsel %vm494, %v739, 0
    %752 = vmatprep.subr.mxu0 0.0
    %753 = vmatpush1.msra.mxu0 0.0
    %754 = vmatprep.subr.mxu0 0.0
    %755 = vmatpush1.msra.mxu0 0.0
    %756 = vmatprep.subr.mxu0 0.0
    %757 = vmatpush1.msra.mxu0 0.0
    %758 = vmatprep.subr.mxu0 0.0
    %759 = vmatpush1.msra.mxu0 0.0
    %760 = vmatprep.subr.mxu0 0.0
    %761 = vmatpush1.msra.mxu0 0.0
    %762 = vmatprep.subr.mxu0 0.0
    %763 = vmatpush1.msra.mxu0 0.0
    %764 = vmatprep.subr.mxu0 0.0
    %765 = vmatpush1.msra.mxu0 0.0
    %766 = vmatprep.subr.mxu0 0.0
    %767 = vmatpush1.msra.mxu0 0.0
    %768 = vmatprep.subr.mxu0 0.0
    %769 = vmatpush1.msra.mxu0 0.0
    %770 = vmatprep.subr.mxu0 0.0
    %771 = vmatpush1.msra.mxu0 0.0
    %772 = vmatprep.subr.mxu0 0.0
    %773 = vmatpush1.msra.mxu0 0.0
    %774 = vmatprep.subr.mxu0 0.0
    %775 = vmatpush1.msra.mxu0 0.0
    %776 = vmatprep.subr.mxu0 0.0
    %777 = vmatpush1.msra.mxu0 0.0
    %778 = vmatprep.subr.mxu0 0.0
    %779 = vmatpush1.msra.mxu0 0.0
    %780 = vmatprep.subr.mxu0 0.0
    %781 = vmatpush1.msra.mxu0 %v741
    %782 = vmatprep.subr.mxu0 0.0
    %783 = vmatpush1.msra.mxu0 %v740
    %784 = vmatprep.subr.mxu0 0.0
    %785 = vmatpush2.msra.mxu0 0.0
    %786 = vmatprep.subr.mxu0 0.0
    %787 = vmatpush2.msra.mxu0 0.0
    %788 = vmatprep.subr.mxu0 0.0
    %789 = vmatpush2.msra.mxu0 0.0
    %790 = vmatprep.subr.mxu0 0.0
    %791 = vmatpush2.msra.mxu0 0.0
    %792 = vmatprep.subr.mxu0 0.0
    %793 = vmatpush2.msra.mxu0 0.0
    %794 = vmatprep.subr.mxu0 0.0
    %795 = vmatpush2.msra.mxu0 0.0
    %796 = vmatprep.subr.mxu0 0.0
    %797 = vmatpush2.msra.mxu0 0.0
    %798 = vmatprep.subr.mxu0 0.0
    %799 = vmatpush2.msra.mxu0 0.0
    %800 = vmatprep.subr.mxu0 0.0
    %801 = vmatpush2.msra.mxu0 0.0
    %802 = vmatprep.subr.mxu0 0.0
    %803 = vmatpush2.msra.mxu0 0.0
    %804 = vmatprep.subr.mxu0 0.0
    %805 = vmatpush2.msra.mxu0 0.0
    %806 = vmatprep.subr.mxu0 0.0
    %807 = vmatpush2.msra.mxu0 0.0
    %808 = vmatprep.subr.mxu0 0.0
    %809 = vmatpush2.msra.mxu0 0.0
    %810 = vmatprep.subr.mxu0 0.0
    %811 = vmatpush2.msra.mxu0 0.0
    %812 = vmatprep.subr.mxu0 0.0
    %813 = vmatpush2.msra.mxu0 0.0
    %814 = vmatprep.subr.mxu0 0.0
    %815 = vmatpush2.msra.mxu0 0.0
    %816 = vmatprep.mubr.f32.mxu0 0.0
    %817 = vmatmul.mubr.f32.gmra.mxu0 %v750
    %v818 = vpop.f32.mrf.mxu0
    %v819 = vadd.f32 %v747, %v818
    %v820 = vpop.f32.mrf.mxu0
    %821 = vdwg.mxu0
    %v822 = vsub.f32 0.0, %v819
    %v823 = vmul.f32 %v822, 1.442695
    %v824 = vpow.pop %v823
    %v825 = vadd.f32 %v824, 1.0
    %v826 = vrcp.pop %v825
    %v827 = vmul.f32 1.0, %v826
    %829 = vset.pattern.permute.xlu0 0
    %830 = vperm.xlu0 %829, %v827
    %v831 = vpop.permute.xlu0 %830
    %v833 = vmul.f32 %v831, %v664
    %v834 = vsub.f32 %v33, %v833
    %v835 = vand.u32 2147483647, %v834
    %vm836 = vcmp.le.f32.partialorder %v835, 0.7853982
    %vm837 = vcmp.lt.s32.totalorder %v834, 0
    %v838 = vand.u32 %v834, 2139095040
    %v839 = vshrl.u32 %v838, 23
    %v840 = vsub.s32 %v839, 127
    %v841 = vand.u32 2147483647, %v834
    %v842 = vand.u32 %v841, 8388607
    %v843 = vor.u32 %v842, 8388608
    %v844 = vsub.s32 0, %v843
    %v845 = vadd.s32 %v840, 1
    %vm846 = vcmp.gt.s32.totalorder %v845, 0
    %v847 = vsel %vm846, %v845, 0
    %v848 = vshrl.u32 %v847, 5
    %v849 = vand.u32 %v847, 31
    %v850 = vsub.s32 32, %v849
    %v851 = vshrl.u32 683565275, %v850
    %v852 = vshll.u32 683565275, %v849
    %v853 = vshrl.u32 2475754826, %v850
    %v854 = vor.u32 %v852, %v853
    %v855 = vshll.u32 2475754826, %v849
    %v856 = vshrl.u32 2131351028, %v850
    %v857 = vor.u32 %v855, %v856
    %v858 = vshll.u32 2131351028, %v849
    %v859 = vshrl.u32 2102212464, %v850
    %v860 = vor.u32 %v858, %v859
    %v861 = vshll.u32 2102212464, %v849
    %v862 = vshrl.u32 920167782, %v850
    %v863 = vor.u32 %v861, %v862
    %v864 = vshll.u32 920167782, %v849
    %v865 = vshrl.u32 1326507024, %v850
    %v866 = vor.u32 %v864, %v865
    %vm867 = vcmp.lt.s32.totalorder %v848, 1
    %vm868 = vcmp.lt.s32.totalorder %v848, 2
    %vm869 = vcmp.lt.s32.totalorder %v848, 3
    %vm870 = vcmp.lt.s32.totalorder %v848, 4
    %v871 = vsel %vm867, %v851, %v854
    %v872 = vsel %vm870, %v860, 2102212464
    %v873 = vsel %vm869, %v857, %v872
    %v874 = vsel %vm868, %v871, %v873
    %v875 = vsel %vm867, %v854, %v857
    %v876 = vsel %vm870, %v863, 920167782
    %v877 = vsel %vm869, %v860, %v876
    %v878 = vsel %vm868, %v875, %v877
    %v879 = vsel %vm867, %v857, %v860
    %v880 = vsel %vm870, %v866, 1326507024
    %v881 = vsel %vm869, %v863, %v880
    %v882 = vsel %vm868, %v879, %v881
    %v883 = vshll.u32 %v843, 8
    %v884 = vmul.u32.u64.compose %v883, %v882
    %v885 = vextract.low.u32 %v884
    %v886 = vextract.high.u32 %v884
    %v887 = vmul.u32.u64.compose %v883, %v878
    %v888 = vextract.low.u32 %v887
    %v889 = vextract.high.u32 %v887
    %v890 = vmul.u32 %v883, %v874
    %v891 = vadd.s32 %v886, %v888
    %vm892 = vc.u32 %v886, %v888
    %v893 = vadd.s32 %v889, 1
    %v894 = vsel %vm892, %v893, %v889
    %v895 = vadd.s32 %v890, %v894
    %v896 = vadd.s32 %v895, 536870912
    %v897 = vshrl.u32 %v896, 30
    %v898 = vshll.u32 %v897, 30
    %v899 = vsub.s32 %v895, %v898
    %vm900 = vcmp.lt.s32.totalorder %v899, 0
    %v901 = vsub.s32 0, %v899
    %v902 = vsel %vm900, %v901, %v899
    %v903 = vclz %v902
    %v904 = vsub.s32 %v903, 2
    %vm905 = vcmp.gt.s32.totalorder 0, %v904
    %v906 = vsel %vm905, 0, %v904
    %v907 = vsub.s32 32, %v906
    %v908 = vshll.u32 %v899, %v906
    %v909 = vshrl.u32 %v891, %v907
    %v910 = vor.u32 %v908, %v909
    %v911 = vsub.s32 4294967266, %v906
    %v912 = vadd.s32 %v911, 127
    %v913 = vshll.u32 %v912, 23
    %v914 = vor.u32 4788187, %v913
    %v915 = vand.u32 2147483647, %v914
    %v917 = vcvt.s32.f32 %v910
    %v918 = vmul.f32 %v917, %v915
    %v919 = vxor.u32 %v918, 2147483648
    %v920 = vsel %vm837, %v919, %v918
    %v921 = vsub.s32 4, %v897
    %v922 = vsel %vm837, %v921, %v897
    %v923 = vsel %vm836, %v834, %v920
    %v924 = vsel %vm836, 0, %v922
    %v925 = vcosq.f32.pop %v923
    %v926 = vsinq.f32.pop %v923
    %vm927 = vweird.f32 %v834
    %v928 = vand.u32 %v924, 3
    %vm929 = vcmp.lt.s32.totalorder %v928, 2
    %vm930 = vcmp.eq.s32.totalorder %v928, 0
    %v931 = vxor.u32 %v926, 2147483648
    %v932 = vsel %vm930, %v925, %v931
    %vm933 = vcmp.eq.s32.totalorder %v928, 2
    %v934 = vxor.u32 %v925, 2147483648
    %v935 = vsel %vm933, %v934, %v926
    %v936 = vsel %vm929, %v932, %v935
    %v937 = vsel %vm927, nan, %v936
    %v938 = vand.u32 2147483647, %v834
    %vm939 = vcmp.le.f32.partialorder %v938, 0.7853982
    %vm940 = vcmp.lt.s32.totalorder %v834, 0
    %v941 = vand.u32 %v834, 2139095040
    %v942 = vshrl.u32 %v941, 23
    %v943 = vsub.s32 %v942, 127
    %v944 = vand.u32 2147483647, %v834
    %v945 = vand.u32 %v944, 8388607
    %v946 = vor.u32 %v945, 8388608
    %v947 = vsub.s32 0, %v946
    %v948 = vadd.s32 %v943, 1
    %vm949 = vcmp.gt.s32.totalorder %v948, 0
    %v950 = vsel %vm949, %v948, 0
    %v951 = vshrl.u32 %v950, 5
    %v952 = vand.u32 %v950, 31
    %v953 = vsub.s32 32, %v952
    %v954 = vshrl.u32 683565275, %v953
    %v955 = vshll.u32 683565275, %v952
    %v956 = vshrl.u32 2475754826, %v953
    %v957 = vor.u32 %v955, %v956
    %v958 = vshll.u32 2475754826, %v952
    %v959 = vshrl.u32 2131351028, %v953
    %v960 = vor.u32 %v958, %v959
    %v961 = vshll.u32 2131351028, %v952
    %v962 = vshrl.u32 2102212464, %v953
    %v963 = vor.u32 %v961, %v962
    %v964 = vshll.u32 2102212464, %v952
    %v965 = vshrl.u32 920167782, %v953
    %v966 = vor.u32 %v964, %v965
    %v967 = vshll.u32 920167782, %v952
    %v968 = vshrl.u32 1326507024, %v953
    %v969 = vor.u32 %v967, %v968
    %vm970 = vcmp.lt.s32.totalorder %v951, 1
    %vm971 = vcmp.lt.s32.totalorder %v951, 2
    %vm972 = vcmp.lt.s32.totalorder %v951, 3
    %vm973 = vcmp.lt.s32.totalorder %v951, 4
    %v974 = vsel %vm970, %v954, %v957
    %v975 = vsel %vm973, %v963, 2102212464
    %v976 = vsel %vm972, %v960, %v975
    %v977 = vsel %vm971, %v974, %v976
    %v978 = vsel %vm970, %v957, %v960
    %v979 = vsel %vm973, %v966, 920167782
    %v980 = vsel %vm972, %v963, %v979
    %v981 = vsel %vm971, %v978, %v980
    %v982 = vsel %vm970, %v960, %v963
    %v983 = vsel %vm973, %v969, 1326507024
    %v984 = vsel %vm972, %v966, %v983
    %v985 = vsel %vm971, %v982, %v984
    %v986 = vshll.u32 %v946, 8
    %v987 = vmul.u32.u64.compose %v986, %v985
    %v988 = vextract.low.u32 %v987
    %v989 = vextract.high.u32 %v987
    %v990 = vmul.u32.u64.compose %v986, %v981
    %v991 = vextract.low.u32 %v990
    %v992 = vextract.high.u32 %v990
    %v993 = vmul.u32 %v986, %v977
    %v994 = vadd.s32 %v989, %v991
    %vm995 = vc.u32 %v989, %v991
    %v996 = vadd.s32 %v992, 1
    %v997 = vsel %vm995, %v996, %v992
    %v998 = vadd.s32 %v993, %v997
    %v999 = vadd.s32 %v998, 536870912
    %v1000 = vshrl.u32 %v999, 30
    %v1001 = vshll.u32 %v1000, 30
    %v1002 = vsub.s32 %v998, %v1001
    %vm1003 = vcmp.lt.s32.totalorder %v1002, 0
    %v1004 = vsub.s32 0, %v1002
    %v1005 = vsel %vm1003, %v1004, %v1002
    %v1006 = vclz %v1005
    %v1007 = vsub.s32 %v1006, 2
    %vm1008 = vcmp.gt.s32.totalorder 0, %v1007
    %v1009 = vsel %vm1008, 0, %v1007
    %v1010 = vsub.s32 32, %v1009
    %v1011 = vshll.u32 %v1002, %v1009
    %v1012 = vshrl.u32 %v994, %v1010
    %v1013 = vor.u32 %v1011, %v1012
    %v1014 = vsub.s32 4294967266, %v1009
    %v1015 = vadd.s32 %v1014, 127
    %v1016 = vshll.u32 %v1015, 23
    %v1017 = vor.u32 4788187, %v1016
    %v1018 = vand.u32 2147483647, %v1017
    %v1020 = vcvt.s32.f32 %v1013
    %v1021 = vmul.f32 %v1020, %v1018
    %v1022 = vxor.u32 %v1021, 2147483648
    %v1023 = vsel %vm940, %v1022, %v1021
    %v1024 = vsub.s32 4, %v1000
    %v1025 = vsel %vm940, %v1024, %v1000
    %v1026 = vsel %vm939, %v834, %v1023
    %v1027 = vsel %vm939, 0, %v1025
    %v1028 = vcosq.f32.pop %v1026
    %v1029 = vsinq.f32.pop %v1026
    %vm1030 = vweird.f32 %v834
    %v1031 = vadd.s32 %v1027, 3
    %v1032 = vand.u32 %v1031, 3
    %vm1033 = vcmp.lt.s32.totalorder %v1032, 2
    %vm1034 = vcmp.eq.s32.totalorder %v1032, 0
    %v1035 = vxor.u32 %v1029, 2147483648
    %v1036 = vsel %vm1034, %v1028, %v1035
    %vm1037 = vcmp.eq.s32.totalorder %v1032, 2
    %v1038 = vxor.u32 %v1028, 2147483648
    %v1039 = vsel %vm1037, %v1038, %v1029
    %v1040 = vsel %vm1033, %v1036, %v1039
    %v1041 = vsel %vm1030, nan, %v1040
    %1043 = vrot.lane.b32.xlu0 %v1041, 16
    %v1044 = vpop.permute.xlu0 %1043
    %v1046 = vsel %vm494, %v937, %v1044
    %v1048 = vsel %vm500, %v1046, 0
    %1050 = vmatprep.subr.mxu0 0.0
    %1051 = vmatpush1.msra.mxu0 0.0
    %1052 = vmatprep.subr.mxu0 0.0
    %1053 = vmatpush1.msra.mxu0 0.0
    %1054 = vmatprep.subr.mxu0 0.0
    %1055 = vmatpush1.msra.mxu0 0.0
    %1056 = vmatprep.subr.mxu0 0.0
    %1057 = vmatpush1.msra.mxu0 0.0
    %1058 = vmatprep.subr.mxu0 0.0
    %1059 = vmatpush1.msra.mxu0 0.0
    %1060 = vmatprep.subr.mxu0 0.0
    %1061 = vmatpush1.msra.mxu0 0.0
    %1062 = vmatprep.subr.mxu0 0.0
    %1063 = vmatpush1.msra.mxu0 0.0
    %1064 = vmatprep.subr.mxu0 0.0
    %1065 = vmatpush1.msra.mxu0 0.0
    %1066 = vmatprep.subr.mxu0 0.0
    %1067 = vmatpush1.msra.mxu0 0.0
    %1068 = vmatprep.subr.mxu0 0.0
    %1069 = vmatpush1.msra.mxu0 0.0
    %1070 = vmatprep.subr.mxu0 0.0
    %1071 = vmatpush1.msra.mxu0 0.0
    %1072 = vmatprep.subr.mxu0 0.0
    %1073 = vmatpush1.msra.mxu0 0.0
    %1074 = vmatprep.subr.mxu0 0.0
    %1075 = vmatpush1.msra.mxu0 %v499
    %1076 = vmatprep.subr.mxu0 0.0
    %1077 = vmatpush1.msra.mxu0 %v498
    %1078 = vmatprep.subr.mxu0 0.0
    %1079 = vmatpush1.msra.mxu0 %v497
    %1080 = vmatprep.subr.mxu0 0.0
    %1081 = vmatpush1.msra.mxu0 %v496
    %1082 = vmatprep.subr.mxu0 0.0
    %1083 = vmatpush2.msra.mxu0 0.0
    %1084 = vmatprep.subr.mxu0 0.0
    %1085 = vmatpush2.msra.mxu0 0.0
    %1086 = vmatprep.subr.mxu0 0.0
    %1087 = vmatpush2.msra.mxu0 0.0
    %1088 = vmatprep.subr.mxu0 0.0
    %1089 = vmatpush2.msra.mxu0 0.0
    %1090 = vmatprep.subr.mxu0 0.0
    %1091 = vmatpush2.msra.mxu0 0.0
    %1092 = vmatprep.subr.mxu0 0.0
    %1093 = vmatpush2.msra.mxu0 0.0
    %1094 = vmatprep.subr.mxu0 0.0
    %1095 = vmatpush2.msra.mxu0 0.0
    %1096 = vmatprep.subr.mxu0 0.0
    %1097 = vmatpush2.msra.mxu0 0.0
    %1098 = vmatprep.subr.mxu0 0.0
    %1099 = vmatpush2.msra.mxu0 0.0
    %1100 = vmatprep.subr.mxu0 0.0
    %1101 = vmatpush2.msra.mxu0 0.0
    %1102 = vmatprep.subr.mxu0 0.0
    %1103 = vmatpush2.msra.mxu0 0.0
    %1104 = vmatprep.subr.mxu0 0.0
    %1105 = vmatpush2.msra.mxu0 0.0
    %1106 = vmatprep.subr.mxu0 0.0
    %1107 = vmatpush2.msra.mxu0 0.0
    %1108 = vmatprep.subr.mxu0 0.0
    %1109 = vmatpush2.msra.mxu0 0.0
    %1110 = vmatprep.subr.mxu0 0.0
    %1111 = vmatpush2.msra.mxu0 0.0
    %1112 = vmatprep.subr.mxu0 0.0
    %1113 = vmatpush2.msra.mxu0 0.0
    %1114 = vmatprep.mubr.f32.mxu0 0.0
    %1115 = vmatmul.mubr.f32.gmra.mxu0 %v1048
    %v1116 = vpop.f32.mrf.mxu0
    %v1117 = vadd.f32 0.0, %v1116
    %v1118 = vpop.f32.mrf.mxu0
    %1119 = vdwg.mxu0
    %v1120 = vrot.slane %v1046, 1
    %v1121 = vsel %vm500, %v1120, 0
    %1123 = vmatprep.subr.mxu0 0.0
    %1124 = vmatpush1.msra.mxu0 0.0
    %1125 = vmatprep.subr.mxu0 0.0
    %1126 = vmatpush1.msra.mxu0 0.0
    %1127 = vmatprep.subr.mxu0 0.0
    %1128 = vmatpush1.msra.mxu0 0.0
    %1129 = vmatprep.subr.mxu0 0.0
    %1130 = vmatpush1.msra.mxu0 0.0
    %1131 = vmatprep.subr.mxu0 0.0
    %1132 = vmatpush1.msra.mxu0 0.0
    %1133 = vmatprep.subr.mxu0 0.0
    %1134 = vmatpush1.msra.mxu0 0.0
    %1135 = vmatprep.subr.mxu0 0.0
    %1136 = vmatpush1.msra.mxu0 0.0
    %1137 = vmatprep.subr.mxu0 0.0
    %1138 = vmatpush1.msra.mxu0 0.0
    %1139 = vmatprep.subr.mxu0 0.0
    %1140 = vmatpush1.msra.mxu0 0.0
    %1141 = vmatprep.subr.mxu0 0.0
    %1142 = vmatpush1.msra.mxu0 0.0
    %1143 = vmatprep.subr.mxu0 0.0
    %1144 = vmatpush1.msra.mxu0 0.0
    %1145 = vmatprep.subr.mxu0 0.0
    %1146 = vmatpush1.msra.mxu0 0.0
    %1147 = vmatprep.subr.mxu0 0.0
    %1148 = vmatpush1.msra.mxu0 %v578
    %1149 = vmatprep.subr.mxu0 0.0
    %1150 = vmatpush1.msra.mxu0 %v577
    %1151 = vmatprep.subr.mxu0 0.0
    %1152 = vmatpush1.msra.mxu0 %v576
    %1153 = vmatprep.subr.mxu0 0.0
    %1154 = vmatpush1.msra.mxu0 %v575
    %1155 = vmatprep.subr.mxu0 0.0
    %1156 = vmatpush2.msra.mxu0 0.0
    %1157 = vmatprep.subr.mxu0 0.0
    %1158 = vmatpush2.msra.mxu0 0.0
    %1159 = vmatprep.subr.mxu0 0.0
    %1160 = vmatpush2.msra.mxu0 0.0
    %1161 = vmatprep.subr.mxu0 0.0
    %1162 = vmatpush2.msra.mxu0 0.0
    %1163 = vmatprep.subr.mxu0 0.0
    %1164 = vmatpush2.msra.mxu0 0.0
    %1165 = vmatprep.subr.mxu0 0.0
    %1166 = vmatpush2.msra.mxu0 0.0
    %1167 = vmatprep.subr.mxu0 0.0
    %1168 = vmatpush2.msra.mxu0 0.0
    %1169 = vmatprep.subr.mxu0 0.0
    %1170 = vmatpush2.msra.mxu0 0.0
    %1171 = vmatprep.subr.mxu0 0.0
    %1172 = vmatpush2.msra.mxu0 0.0
    %1173 = vmatprep.subr.mxu0 0.0
    %1174 = vmatpush2.msra.mxu0 0.0
    %1175 = vmatprep.subr.mxu0 0.0
    %1176 = vmatpush2.msra.mxu0 0.0
    %1177 = vmatprep.subr.mxu0 0.0
    %1178 = vmatpush2.msra.mxu0 0.0
    %1179 = vmatprep.subr.mxu0 0.0
    %1180 = vmatpush2.msra.mxu0 0.0
    %1181 = vmatprep.subr.mxu0 0.0
    %1182 = vmatpush2.msra.mxu0 0.0
    %1183 = vmatprep.subr.mxu0 0.0
    %1184 = vmatpush2.msra.mxu0 0.0
    %1185 = vmatprep.subr.mxu0 0.0
    %1186 = vmatpush2.msra.mxu0 0.0
    %1187 = vmatprep.mubr.f32.mxu0 0.0
    %1188 = vmatmul.mubr.f32.gmra.mxu0 %v1121
    %v1189 = vpop.f32.mrf.mxu0
    %v1190 = vadd.f32 0.0, %v1189
    %v1191 = vpop.f32.mrf.mxu0
    %1192 = vdwg.mxu0
    %v1194 = vrot.slane %v1190, 7
    %v1196 = vsel %vm655, %v1117, %v1194
    %1198 = vrot.lane.b32.xlu0 %v1196, 112
    %v1199 = vpop.permute.xlu0 %1198
    %v1201 = vmul.f32 %v937, %v1199
    %v1202 = vmul.f32 %v1041, %v1196
    %v1203 = vsub.f32 %v1201, %v1202
    %v1204 = vmul.f32 %v1203, 2.0
    %s1205 = scalar_lea.vmem %s3, 32
    %v1206 = vld [vmem:[%s1205] sm:$0xff]
    %v1207 = vld [vmem:[%s1205 + $0x8] sm:$0xff]
    %v1208 = vld [vmem:[%s1205 + $0x10] sm:$0xff]
    %v1209 = vld [vmem:[%s1205 + $0x18] sm:$0xff]
    %1210 = vmatprep.subr.mxu0 0.0
    %1211 = vmatpush1.msra.mxu0 0.0
    %1212 = vmatprep.subr.mxu0 0.0
    %1213 = vmatpush1.msra.mxu0 0.0
    %1214 = vmatprep.subr.mxu0 0.0
    %1215 = vmatpush1.msra.mxu0 0.0
    %1216 = vmatprep.subr.mxu0 0.0
    %1217 = vmatpush1.msra.mxu0 0.0
    %1218 = vmatprep.subr.mxu0 0.0
    %1219 = vmatpush1.msra.mxu0 0.0
    %1220 = vmatprep.subr.mxu0 0.0
    %1221 = vmatpush1.msra.mxu0 0.0
    %1222 = vmatprep.subr.mxu0 0.0
    %1223 = vmatpush1.msra.mxu0 0.0
    %1224 = vmatprep.subr.mxu0 0.0
    %1225 = vmatpush1.msra.mxu0 0.0
    %1226 = vmatprep.subr.mxu0 0.0
    %1227 = vmatpush1.msra.mxu0 0.0
    %1228 = vmatprep.subr.mxu0 0.0
    %1229 = vmatpush1.msra.mxu0 0.0
    %1230 = vmatprep.subr.mxu0 0.0
    %1231 = vmatpush1.msra.mxu0 0.0
    %1232 = vmatprep.subr.mxu0 0.0
    %1233 = vmatpush1.msra.mxu0 0.0
    %1234 = vmatprep.subr.mxu0 0.0
    %1235 = vmatpush1.msra.mxu0 %v1209
    %1236 = vmatprep.subr.mxu0 0.0
    %1237 = vmatpush1.msra.mxu0 %v1208
    %1238 = vmatprep.subr.mxu0 0.0
    %1239 = vmatpush1.msra.mxu0 %v1207
    %1240 = vmatprep.subr.mxu0 0.0
    %1241 = vmatpush1.msra.mxu0 %v1206
    %1242 = vmatprep.subr.mxu0 0.0
    %1243 = vmatpush2.msra.mxu0 0.0
    %1244 = vmatprep.subr.mxu0 0.0
    %1245 = vmatpush2.msra.mxu0 0.0
    %1246 = vmatprep.subr.mxu0 0.0
    %1247 = vmatpush2.msra.mxu0 0.0
    %1248 = vmatprep.subr.mxu0 0.0
    %1249 = vmatpush2.msra.mxu0 0.0
    %1250 = vmatprep.subr.mxu0 0.0
    %1251 = vmatpush2.msra.mxu0 0.0
    %1252 = vmatprep.subr.mxu0 0.0
    %1253 = vmatpush2.msra.mxu0 0.0
    %1254 = vmatprep.subr.mxu0 0.0
    %1255 = vmatpush2.msra.mxu0 0.0
    %1256 = vmatprep.subr.mxu0 0.0
    %1257 = vmatpush2.msra.mxu0 0.0
    %1258 = vmatprep.subr.mxu0 0.0
    %1259 = vmatpush2.msra.mxu0 0.0
    %1260 = vmatprep.subr.mxu0 0.0
    %1261 = vmatpush2.msra.mxu0 0.0
    %1262 = vmatprep.subr.mxu0 0.0
    %1263 = vmatpush2.msra.mxu0 0.0
    %1264 = vmatprep.subr.mxu0 0.0
    %1265 = vmatpush2.msra.mxu0 0.0
    %1266 = vmatprep.subr.mxu0 0.0
    %1267 = vmatpush2.msra.mxu0 0.0
    %1268 = vmatprep.subr.mxu0 0.0
    %1269 = vmatpush2.msra.mxu0 0.0
    %1270 = vmatprep.subr.mxu0 0.0
    %1271 = vmatpush2.msra.mxu0 0.0
    %1272 = vmatprep.subr.mxu0 0.0
    %1273 = vmatpush2.msra.mxu0 0.0
    %1274 = vmatprep.mubr.f32.mxu0 0.0
    %1275 = vmatmul.mubr.f32.gmra.mxu0 %v1048
    %v1276 = vpop.f32.mrf.mxu0
    %v1277 = vadd.f32 %v198, %v1276
    %v1278 = vpop.f32.mrf.mxu0
    %1279 = vdwg.mxu0
    %v1280 = vmax.f32 %v1277, 0.0
    %s1281 = scalar_lea.vmem %s6, 16
    %v1282 = vld [vmem:[%s1281] sm:$0xff]
    %v1283 = vld [vmem:[%s1281 + $0x8] sm:$0xff]
    %s1284 = scalar_lea.vmem %s7, 1
    %v1285 = vld [vmem:[%s1284] sm:$0x1]
    %v1287 = vlaneseq
    %v1288 = vshrl.u32 %v1287, 7
    %v1289 = vsub.s32 0, %v1288
    %v1290 = vrot.slane %v1285, %v1289
    %v1293 = vsel %vm494, %v1280, 0
    %1295 = vmatprep.subr.mxu0 0.0
    %1296 = vmatpush1.msra.mxu0 0.0
    %1297 = vmatprep.subr.mxu0 0.0
    %1298 = vmatpush1.msra.mxu0 0.0
    %1299 = vmatprep.subr.mxu0 0.0
    %1300 = vmatpush1.msra.mxu0 0.0
    %1301 = vmatprep.subr.mxu0 0.0
    %1302 = vmatpush1.msra.mxu0 0.0
    %1303 = vmatprep.subr.mxu0 0.0
    %1304 = vmatpush1.msra.mxu0 0.0
    %1305 = vmatprep.subr.mxu0 0.0
    %1306 = vmatpush1.msra.mxu0 0.0
    %1307 = vmatprep.subr.mxu0 0.0
    %1308 = vmatpush1.msra.mxu0 0.0
    %1309 = vmatprep.subr.mxu0 0.0
    %1310 = vmatpush1.msra.mxu0 0.0
    %1311 = vmatprep.subr.mxu0 0.0
    %1312 = vmatpush1.msra.mxu0 0.0
    %1313 = vmatprep.subr.mxu0 0.0
    %1314 = vmatpush1.msra.mxu0 0.0
    %1315 = vmatprep.subr.mxu0 0.0
    %1316 = vmatpush1.msra.mxu0 0.0
    %1317 = vmatprep.subr.mxu0 0.0
    %1318 = vmatpush1.msra.mxu0 0.0
    %1319 = vmatprep.subr.mxu0 0.0
    %1320 = vmatpush1.msra.mxu0 0.0
    %1321 = vmatprep.subr.mxu0 0.0
    %1322 = vmatpush1.msra.mxu0 0.0
    %1323 = vmatprep.subr.mxu0 0.0
    %1324 = vmatpush1.msra.mxu0 %v1283
    %1325 = vmatprep.subr.mxu0 0.0
    %1326 = vmatpush1.msra.mxu0 %v1282
    %1327 = vmatprep.subr.mxu0 0.0
    %1328 = vmatpush2.msra.mxu0 0.0
    %1329 = vmatprep.subr.mxu0 0.0
    %1330 = vmatpush2.msra.mxu0 0.0
    %1331 = vmatprep.subr.mxu0 0.0
    %1332 = vmatpush2.msra.mxu0 0.0
    %1333 = vmatprep.subr.mxu0 0.0
    %1334 = vmatpush2.msra.mxu0 0.0
    %1335 = vmatprep.subr.mxu0 0.0
    %1336 = vmatpush2.msra.mxu0 0.0
    %1337 = vmatprep.subr.mxu0 0.0
    %1338 = vmatpush2.msra.mxu0 0.0
    %1339 = vmatprep.subr.mxu0 0.0
    %1340 = vmatpush2.msra.mxu0 0.0
    %1341 = vmatprep.subr.mxu0 0.0
    %1342 = vmatpush2.msra.mxu0 0.0
    %1343 = vmatprep.subr.mxu0 0.0
    %1344 = vmatpush2.msra.mxu0 0.0
    %1345 = vmatprep.subr.mxu0 0.0
    %1346 = vmatpush2.msra.mxu0 0.0
    %1347 = vmatprep.subr.mxu0 0.0
    %1348 = vmatpush2.msra.mxu0 0.0
    %1349 = vmatprep.subr.mxu0 0.0
    %1350 = vmatpush2.msra.mxu0 0.0
    %1351 = vmatprep.subr.mxu0 0.0
    %1352 = vmatpush2.msra.mxu0 0.0
    %1353 = vmatprep.subr.mxu0 0.0
    %1354 = vmatpush2.msra.mxu0 0.0
    %1355 = vmatprep.subr.mxu0 0.0
    %1356 = vmatpush2.msra.mxu0 0.0
    %1357 = vmatprep.subr.mxu0 0.0
    %1358 = vmatpush2.msra.mxu0 0.0
    %1359 = vmatprep.mubr.f32.mxu0 0.0
    %1360 = vmatmul.mubr.f32.gmra.mxu0 %v1293
    %v1361 = vpop.f32.mrf.mxu0
    %v1362 = vadd.f32 %v1290, %v1361
    %v1363 = vpop.f32.mrf.mxu0
    %1364 = vdwg.mxu0
    %v1365 = vsub.f32 0.0, %v1362
    %v1366 = vmul.f32 %v1365, 1.442695
    %v1367 = vpow.pop %v1366
    %v1368 = vadd.f32 %v1367, 1.0
    %v1369 = vrcp.pop %v1368
    %v1370 = vmul.f32 1.0, %v1369
    %1372 = vset.pattern.permute.xlu0 0
    %1373 = vperm.xlu0 %1372, %v1370
    %v1374 = vpop.permute.xlu0 %1373
    %v1376 = vmul.f32 %v1374, %v1204
    %v1377 = vsub.f32 %v834, %v1376
    %v1378 = vand.u32 2147483647, %v1377
    %vm1379 = vcmp.le.f32.partialorder %v1378, 0.7853982
    %vm1380 = vcmp.lt.s32.totalorder %v1377, 0
    %v1381 = vand.u32 %v1377, 2139095040
    %v1382 = vshrl.u32 %v1381, 23
    %v1383 = vsub.s32 %v1382, 127
    %v1384 = vand.u32 2147483647, %v1377
    %v1385 = vand.u32 %v1384, 8388607
    %v1386 = vor.u32 %v1385, 8388608
    %v1387 = vsub.s32 0, %v1386
    %v1388 = vadd.s32 %v1383, 1
    %vm1389 = vcmp.gt.s32.totalorder %v1388, 0
    %v1390 = vsel %vm1389, %v1388, 0
    %v1391 = vshrl.u32 %v1390, 5
    %v1392 = vand.u32 %v1390, 31
    %v1393 = vsub.s32 32, %v1392
    %v1394 = vshrl.u32 683565275, %v1393
    %v1395 = vshll.u32 683565275, %v1392
    %v1396 = vshrl.u32 2475754826, %v1393
    %v1397 = vor.u32 %v1395, %v1396
    %v1398 = vshll.u32 2475754826, %v1392
    %v1399 = vshrl.u32 2131351028, %v1393
    %v1400 = vor.u32 %v1398, %v1399
    %v1401 = vshll.u32 2131351028, %v1392
    %v1402 = vshrl.u32 2102212464, %v1393
    %v1403 = vor.u32 %v1401, %v1402
    %v1404 = vshll.u32 2102212464, %v1392
    %v1405 = vshrl.u32 920167782, %v1393
    %v1406 = vor.u32 %v1404, %v1405
    %v1407 = vshll.u32 920167782, %v1392
    %v1408 = vshrl.u32 1326507024, %v1393
    %v1409 = vor.u32 %v1407, %v1408
    %vm1410 = vcmp.lt.s32.totalorder %v1391, 1
    %vm1411 = vcmp.lt.s32.totalorder %v1391, 2
    %vm1412 = vcmp.lt.s32.totalorder %v1391, 3
    %vm1413 = vcmp.lt.s32.totalorder %v1391, 4
    %v1414 = vsel %vm1410, %v1394, %v1397
    %v1415 = vsel %vm1413, %v1403, 2102212464
    %v1416 = vsel %vm1412, %v1400, %v1415
    %v1417 = vsel %vm1411, %v1414, %v1416
    %v1418 = vsel %vm1410, %v1397, %v1400
    %v1419 = vsel %vm1413, %v1406, 920167782
    %v1420 = vsel %vm1412, %v1403, %v1419
    %v1421 = vsel %vm1411, %v1418, %v1420
    %v1422 = vsel %vm1410, %v1400, %v1403
    %v1423 = vsel %vm1413, %v1409, 1326507024
    %v1424 = vsel %vm1412, %v1406, %v1423
    %v1425 = vsel %vm1411, %v1422, %v1424
    %v1426 = vshll.u32 %v1386, 8
    %v1427 = vmul.u32.u64.compose %v1426, %v1425
    %v1428 = vextract.low.u32 %v1427
    %v1429 = vextract.high.u32 %v1427
    %v1430 = vmul.u32.u64.compose %v1426, %v1421
    %v1431 = vextract.low.u32 %v1430
    %v1432 = vextract.high.u32 %v1430
    %v1433 = vmul.u32 %v1426, %v1417
    %v1434 = vadd.s32 %v1429, %v1431
    %vm1435 = vc.u32 %v1429, %v1431
    %v1436 = vadd.s32 %v1432, 1
    %v1437 = vsel %vm1435, %v1436, %v1432
    %v1438 = vadd.s32 %v1433, %v1437
    %v1439 = vadd.s32 %v1438, 536870912
    %v1440 = vshrl.u32 %v1439, 30
    %v1441 = vshll.u32 %v1440, 30
    %v1442 = vsub.s32 %v1438, %v1441
    %vm1443 = vcmp.lt.s32.totalorder %v1442, 0
    %v1444 = vsub.s32 0, %v1442
    %v1445 = vsel %vm1443, %v1444, %v1442
    %v1446 = vclz %v1445
    %v1447 = vsub.s32 %v1446, 2
    %vm1448 = vcmp.gt.s32.totalorder 0, %v1447
    %v1449 = vsel %vm1448, 0, %v1447
    %v1450 = vsub.s32 32, %v1449
    %v1451 = vshll.u32 %v1442, %v1449
    %v1452 = vshrl.u32 %v1434, %v1450
    %v1453 = vor.u32 %v1451, %v1452
    %v1454 = vsub.s32 4294967266, %v1449
    %v1455 = vadd.s32 %v1454, 127
    %v1456 = vshll.u32 %v1455, 23
    %v1457 = vor.u32 4788187, %v1456
    %v1458 = vand.u32 2147483647, %v1457
    %v1460 = vcvt.s32.f32 %v1453
    %v1461 = vmul.f32 %v1460, %v1458
    %v1462 = vxor.u32 %v1461, 2147483648
    %v1463 = vsel %vm1380, %v1462, %v1461
    %v1464 = vsub.s32 4, %v1440
    %v1465 = vsel %vm1380, %v1464, %v1440
    %v1466 = vsel %vm1379, %v1377, %v1463
    %v1467 = vsel %vm1379, 0, %v1465
    %v1468 = vcosq.f32.pop %v1466
    %v1469 = vsinq.f32.pop %v1466
    %vm1470 = vweird.f32 %v1377
    %v1471 = vand.u32 %v1467, 3
    %vm1472 = vcmp.lt.s32.totalorder %v1471, 2
    %vm1473 = vcmp.eq.s32.totalorder %v1471, 0
    %v1474 = vxor.u32 %v1469, 2147483648
    %v1475 = vsel %vm1473, %v1468, %v1474
    %vm1476 = vcmp.eq.s32.totalorder %v1471, 2
    %v1477 = vxor.u32 %v1468, 2147483648
    %v1478 = vsel %vm1476, %v1477, %v1469
    %v1479 = vsel %vm1472, %v1475, %v1478
    %v1480 = vsel %vm1470, nan, %v1479
    %v1481 = vand.u32 2147483647, %v1377
    %vm1482 = vcmp.le.f32.partialorder %v1481, 0.7853982
    %vm1483 = vcmp.lt.s32.totalorder %v1377, 0
    %v1484 = vand.u32 %v1377, 2139095040
    %v1485 = vshrl.u32 %v1484, 23
    %v1486 = vsub.s32 %v1485, 127
    %v1487 = vand.u32 2147483647, %v1377
    %v1488 = vand.u32 %v1487, 8388607
    %v1489 = vor.u32 %v1488, 8388608
    %v1490 = vsub.s32 0, %v1489
    %v1491 = vadd.s32 %v1486, 1
    %vm1492 = vcmp.gt.s32.totalorder %v1491, 0
    %v1493 = vsel %vm1492, %v1491, 0
    %v1494 = vshrl.u32 %v1493, 5
    %v1495 = vand.u32 %v1493, 31
    %v1496 = vsub.s32 32, %v1495
    %v1497 = vshrl.u32 683565275, %v1496
    %v1498 = vshll.u32 683565275, %v1495
    %v1499 = vshrl.u32 2475754826, %v1496
    %v1500 = vor.u32 %v1498, %v1499
    %v1501 = vshll.u32 2475754826, %v1495
    %v1502 = vshrl.u32 2131351028, %v1496
    %v1503 = vor.u32 %v1501, %v1502
    %v1504 = vshll.u32 2131351028, %v1495
    %v1505 = vshrl.u32 2102212464, %v1496
    %v1506 = vor.u32 %v1504, %v1505
    %v1507 = vshll.u32 2102212464, %v1495
    %v1508 = vshrl.u32 920167782, %v1496
    %v1509 = vor.u32 %v1507, %v1508
    %v1510 = vshll.u32 920167782, %v1495
    %v1511 = vshrl.u32 1326507024, %v1496
    %v1512 = vor.u32 %v1510, %v1511
    %vm1513 = vcmp.lt.s32.totalorder %v1494, 1
    %vm1514 = vcmp.lt.s32.totalorder %v1494, 2
    %vm1515 = vcmp.lt.s32.totalorder %v1494, 3
    %vm1516 = vcmp.lt.s32.totalorder %v1494, 4
    %v1517 = vsel %vm1513, %v1497, %v1500
    %v1518 = vsel %vm1516, %v1506, 2102212464
    %v1519 = vsel %vm1515, %v1503, %v1518
    %v1520 = vsel %vm1514, %v1517, %v1519
    %v1521 = vsel %vm1513, %v1500, %v1503
    %v1522 = vsel %vm1516, %v1509, 920167782
    %v1523 = vsel %vm1515, %v1506, %v1522
    %v1524 = vsel %vm1514, %v1521, %v1523
    %v1525 = vsel %vm1513, %v1503, %v1506
    %v1526 = vsel %vm1516, %v1512, 1326507024
    %v1527 = vsel %vm1515, %v1509, %v1526
    %v1528 = vsel %vm1514, %v1525, %v1527
    %v1529 = vshll.u32 %v1489, 8
    %v1530 = vmul.u32.u64.compose %v1529, %v1528
    %v1531 = vextract.low.u32 %v1530
    %v1532 = vextract.high.u32 %v1530
    %v1533 = vmul.u32.u64.compose %v1529, %v1524
    %v1534 = vextract.low.u32 %v1533
    %v1535 = vextract.high.u32 %v1533
    %v1536 = vmul.u32 %v1529, %v1520
    %v1537 = vadd.s32 %v1532, %v1534
    %vm1538 = vc.u32 %v1532, %v1534
    %v1539 = vadd.s32 %v1535, 1
    %v1540 = vsel %vm1538, %v1539, %v1535
    %v1541 = vadd.s32 %v1536, %v1540
    %v1542 = vadd.s32 %v1541, 536870912
    %v1543 = vshrl.u32 %v1542, 30
    %v1544 = vshll.u32 %v1543, 30
    %v1545 = vsub.s32 %v1541, %v1544
    %vm1546 = vcmp.lt.s32.totalorder %v1545, 0
    %v1547 = vsub.s32 0, %v1545
    %v1548 = vsel %vm1546, %v1547, %v1545
    %v1549 = vclz %v1548
    %v1550 = vsub.s32 %v1549, 2
    %vm1551 = vcmp.gt.s32.totalorder 0, %v1550
    %v1552 = vsel %vm1551, 0, %v1550
    %v1553 = vsub.s32 32, %v1552
    %v1554 = vshll.u32 %v1545, %v1552
    %v1555 = vshrl.u32 %v1537, %v1553
    %v1556 = vor.u32 %v1554, %v1555
    %v1557 = vsub.s32 4294967266, %v1552
    %v1558 = vadd.s32 %v1557, 127
    %v1559 = vshll.u32 %v1558, 23
    %v1560 = vor.u32 4788187, %v1559
    %v1561 = vand.u32 2147483647, %v1560
    %v1563 = vcvt.s32.f32 %v1556
    %v1564 = vmul.f32 %v1563, %v1561
    %v1565 = vxor.u32 %v1564, 2147483648
    %v1566 = vsel %vm1483, %v1565, %v1564
    %v1567 = vsub.s32 4, %v1543
    %v1568 = vsel %vm1483, %v1567, %v1543
    %v1569 = vsel %vm1482, %v1377, %v1566
    %v1570 = vsel %vm1482, 0, %v1568
    %v1571 = vcosq.f32.pop %v1569
    %v1572 = vsinq.f32.pop %v1569
    %vm1573 = vweird.f32 %v1377
    %v1574 = vadd.s32 %v1570, 3
    %v1575 = vand.u32 %v1574, 3
    %vm1576 = vcmp.lt.s32.totalorder %v1575, 2
    %vm1577 = vcmp.eq.s32.totalorder %v1575, 0
    %v1578 = vxor.u32 %v1572, 2147483648
    %v1579 = vsel %vm1577, %v1571, %v1578
    %vm1580 = vcmp.eq.s32.totalorder %v1575, 2
    %v1581 = vxor.u32 %v1571, 2147483648
    %v1582 = vsel %vm1580, %v1581, %v1572
    %v1583 = vsel %vm1576, %v1579, %v1582
    %v1584 = vsel %vm1573, nan, %v1583
    %1586 = vrot.lane.b32.xlu0 %v1584, 16
    %v1587 = vpop.permute.xlu0 %1586
    %v1589 = vsel %vm494, %v1480, %v1587
    %v1591 = vsel %vm500, %v1589, 0
    %1593 = vmatprep.subr.mxu0 0.0
    %1594 = vmatpush1.msra.mxu0 0.0
    %1595 = vmatprep.subr.mxu0 0.0
    %1596 = vmatpush1.msra.mxu0 0.0
    %1597 = vmatprep.subr.mxu0 0.0
    %1598 = vmatpush1.msra.mxu0 0.0
    %1599 = vmatprep.subr.mxu0 0.0
    %1600 = vmatpush1.msra.mxu0 0.0
    %1601 = vmatprep.subr.mxu0 0.0
    %1602 = vmatpush1.msra.mxu0 0.0
    %1603 = vmatprep.subr.mxu0 0.0
    %1604 = vmatpush1.msra.mxu0 0.0
    %1605 = vmatprep.subr.mxu0 0.0
    %1606 = vmatpush1.msra.mxu0 0.0
    %1607 = vmatprep.subr.mxu0 0.0
    %1608 = vmatpush1.msra.mxu0 0.0
    %1609 = vmatprep.subr.mxu0 0.0
    %1610 = vmatpush1.msra.mxu0 0.0
    %1611 = vmatprep.subr.mxu0 0.0
    %1612 = vmatpush1.msra.mxu0 0.0
    %1613 = vmatprep.subr.mxu0 0.0
    %1614 = vmatpush1.msra.mxu0 0.0
    %1615 = vmatprep.subr.mxu0 0.0
    %1616 = vmatpush1.msra.mxu0 0.0
    %1617 = vmatprep.subr.mxu0 0.0
    %1618 = vmatpush1.msra.mxu0 %v499
    %1619 = vmatprep.subr.mxu0 0.0
    %1620 = vmatpush1.msra.mxu0 %v498
    %1621 = vmatprep.subr.mxu0 0.0
    %1622 = vmatpush1.msra.mxu0 %v497
    %1623 = vmatprep.subr.mxu0 0.0
    %1624 = vmatpush1.msra.mxu0 %v496
    %1625 = vmatprep.subr.mxu0 0.0
    %1626 = vmatpush2.msra.mxu0 0.0
    %1627 = vmatprep.subr.mxu0 0.0
    %1628 = vmatpush2.msra.mxu0 0.0
    %1629 = vmatprep.subr.mxu0 0.0
    %1630 = vmatpush2.msra.mxu0 0.0
    %1631 = vmatprep.subr.mxu0 0.0
    %1632 = vmatpush2.msra.mxu0 0.0
    %1633 = vmatprep.subr.mxu0 0.0
    %1634 = vmatpush2.msra.mxu0 0.0
    %1635 = vmatprep.subr.mxu0 0.0
    %1636 = vmatpush2.msra.mxu0 0.0
    %1637 = vmatprep.subr.mxu0 0.0
    %1638 = vmatpush2.msra.mxu0 0.0
    %1639 = vmatprep.subr.mxu0 0.0
    %1640 = vmatpush2.msra.mxu0 0.0
    %1641 = vmatprep.subr.mxu0 0.0
    %1642 = vmatpush2.msra.mxu0 0.0
    %1643 = vmatprep.subr.mxu0 0.0
    %1644 = vmatpush2.msra.mxu0 0.0
    %1645 = vmatprep.subr.mxu0 0.0
    %1646 = vmatpush2.msra.mxu0 0.0
    %1647 = vmatprep.subr.mxu0 0.0
    %1648 = vmatpush2.msra.mxu0 0.0
    %1649 = vmatprep.subr.mxu0 0.0
    %1650 = vmatpush2.msra.mxu0 0.0
    %1651 = vmatprep.subr.mxu0 0.0
    %1652 = vmatpush2.msra.mxu0 0.0
    %1653 = vmatprep.subr.mxu0 0.0
    %1654 = vmatpush2.msra.mxu0 0.0
    %1655 = vmatprep.subr.mxu0 0.0
    %1656 = vmatpush2.msra.mxu0 0.0
    %1657 = vmatprep.mubr.f32.mxu0 0.0
    %1658 = vmatmul.mubr.f32.gmra.mxu0 %v1591
    %v1659 = vpop.f32.mrf.mxu0
    %v1660 = vadd.f32 0.0, %v1659
    %v1661 = vpop.f32.mrf.mxu0
    %1662 = vdwg.mxu0
    %v1663 = vrot.slane %v1589, 1
    %v1664 = vsel %vm500, %v1663, 0
    %1666 = vmatprep.subr.mxu0 0.0
    %1667 = vmatpush1.msra.mxu0 0.0
    %1668 = vmatprep.subr.mxu0 0.0
    %1669 = vmatpush1.msra.mxu0 0.0
    %1670 = vmatprep.subr.mxu0 0.0
    %1671 = vmatpush1.msra.mxu0 0.0
    %1672 = vmatprep.subr.mxu0 0.0
    %1673 = vmatpush1.msra.mxu0 0.0
    %1674 = vmatprep.subr.mxu0 0.0
    %1675 = vmatpush1.msra.mxu0 0.0
    %1676 = vmatprep.subr.mxu0 0.0
    %1677 = vmatpush1.msra.mxu0 0.0
    %1678 = vmatprep.subr.mxu0 0.0
    %1679 = vmatpush1.msra.mxu0 0.0
    %1680 = vmatprep.subr.mxu0 0.0
    %1681 = vmatpush1.msra.mxu0 0.0
    %1682 = vmatprep.subr.mxu0 0.0
    %1683 = vmatpush1.msra.mxu0 0.0
    %1684 = vmatprep.subr.mxu0 0.0
    %1685 = vmatpush1.msra.mxu0 0.0
    %1686 = vmatprep.subr.mxu0 0.0
    %1687 = vmatpush1.msra.mxu0 0.0
    %1688 = vmatprep.subr.mxu0 0.0
    %1689 = vmatpush1.msra.mxu0 0.0
    %1690 = vmatprep.subr.mxu0 0.0
    %1691 = vmatpush1.msra.mxu0 %v578
    %1692 = vmatprep.subr.mxu0 0.0
    %1693 = vmatpush1.msra.mxu0 %v577
    %1694 = vmatprep.subr.mxu0 0.0
    %1695 = vmatpush1.msra.mxu0 %v576
    %1696 = vmatprep.subr.mxu0 0.0
    %1697 = vmatpush1.msra.mxu0 %v575
    %1698 = vmatprep.subr.mxu0 0.0
    %1699 = vmatpush2.msra.mxu0 0.0
    %1700 = vmatprep.subr.mxu0 0.0
    %1701 = vmatpush2.msra.mxu0 0.0
    %1702 = vmatprep.subr.mxu0 0.0
    %1703 = vmatpush2.msra.mxu0 0.0
    %1704 = vmatprep.subr.mxu0 0.0
    %1705 = vmatpush2.msra.mxu0 0.0
    %1706 = vmatprep.subr.mxu0 0.0
    %1707 = vmatpush2.msra.mxu0 0.0
    %1708 = vmatprep.subr.mxu0 0.0
    %1709 = vmatpush2.msra.mxu0 0.0
    %1710 = vmatprep.subr.mxu0 0.0
    %1711 = vmatpush2.msra.mxu0 0.0
    %1712 = vmatprep.subr.mxu0 0.0
    %1713 = vmatpush2.msra.mxu0 0.0
    %1714 = vmatprep.subr.mxu0 0.0
    %1715 = vmatpush2.msra.mxu0 0.0
    %1716 = vmatprep.subr.mxu0 0.0
    %1717 = vmatpush2.msra.mxu0 0.0
    %1718 = vmatprep.subr.mxu0 0.0
    %1719 = vmatpush2.msra.mxu0 0.0
    %1720 = vmatprep.subr.mxu0 0.0
    %1721 = vmatpush2.msra.mxu0 0.0
    %1722 = vmatprep.subr.mxu0 0.0
    %1723 = vmatpush2.msra.mxu0 0.0
    %1724 = vmatprep.subr.mxu0 0.0
    %1725 = vmatpush2.msra.mxu0 0.0
    %1726 = vmatprep.subr.mxu0 0.0
    %1727 = vmatpush2.msra.mxu0 0.0
    %1728 = vmatprep.subr.mxu0 0.0
    %1729 = vmatpush2.msra.mxu0 0.0
    %1730 = vmatprep.mubr.f32.mxu0 0.0
    %1731 = vmatmul.mubr.f32.gmra.mxu0 %v1664
    %v1732 = vpop.f32.mrf.mxu0
    %v1733 = vadd.f32 0.0, %v1732
    %v1734 = vpop.f32.mrf.mxu0
    %1735 = vdwg.mxu0
    %v1737 = vrot.slane %v1733, 7
    %v1739 = vsel %vm655, %v1660, %v1737
    %1741 = vrot.lane.b32.xlu0 %v1739, 112
    %v1742 = vpop.permute.xlu0 %1741
    %v1744 = vmul.f32 %v1480, %v1742
    %v1745 = vmul.f32 %v1584, %v1739
    %v1746 = vsub.f32 %v1744, %v1745
    %v1747 = vmul.f32 %v1746, 2.0
    %s1748 = scalar_lea.vmem %s3, 64
    %v1749 = vld [vmem:[%s1748] sm:$0xff]
    %v1750 = vld [vmem:[%s1748 + $0x8] sm:$0xff]
    %v1751 = vld [vmem:[%s1748 + $0x10] sm:$0xff]
    %v1752 = vld [vmem:[%s1748 + $0x18] sm:$0xff]
    %1753 = vmatprep.subr.mxu0 0.0
    %1754 = vmatpush1.msra.mxu0 0.0
    %1755 = vmatprep.subr.mxu0 0.0
    %1756 = vmatpush1.msra.mxu0 0.0
    %1757 = vmatprep.subr.mxu0 0.0
    %1758 = vmatpush1.msra.mxu0 0.0
    %1759 = vmatprep.subr.mxu0 0.0
    %1760 = vmatpush1.msra.mxu0 0.0
    %1761 = vmatprep.subr.mxu0 0.0
    %1762 = vmatpush1.msra.mxu0 0.0
    %1763 = vmatprep.subr.mxu0 0.0
    %1764 = vmatpush1.msra.mxu0 0.0
    %1765 = vmatprep.subr.mxu0 0.0
    %1766 = vmatpush1.msra.mxu0 0.0
    %1767 = vmatprep.subr.mxu0 0.0
    %1768 = vmatpush1.msra.mxu0 0.0
    %1769 = vmatprep.subr.mxu0 0.0
    %1770 = vmatpush1.msra.mxu0 0.0
    %1771 = vmatprep.subr.mxu0 0.0
    %1772 = vmatpush1.msra.mxu0 0.0
    %1773 = vmatprep.subr.mxu0 0.0
    %1774 = vmatpush1.msra.mxu0 0.0
    %1775 = vmatprep.subr.mxu0 0.0
    %1776 = vmatpush1.msra.mxu0 0.0
    %1777 = vmatprep.subr.mxu0 0.0
    %1778 = vmatpush1.msra.mxu0 %v1752
    %1779 = vmatprep.subr.mxu0 0.0
    %1780 = vmatpush1.msra.mxu0 %v1751
    %1781 = vmatprep.subr.mxu0 0.0
    %1782 = vmatpush1.msra.mxu0 %v1750
    %1783 = vmatprep.subr.mxu0 0.0
    %1784 = vmatpush1.msra.mxu0 %v1749
    %1785 = vmatprep.subr.mxu0 0.0
    %1786 = vmatpush2.msra.mxu0 0.0
    %1787 = vmatprep.subr.mxu0 0.0
    %1788 = vmatpush2.msra.mxu0 0.0
    %1789 = vmatprep.subr.mxu0 0.0
    %1790 = vmatpush2.msra.mxu0 0.0
    %1791 = vmatprep.subr.mxu0 0.0
    %1792 = vmatpush2.msra.mxu0 0.0
    %1793 = vmatprep.subr.mxu0 0.0
    %1794 = vmatpush2.msra.mxu0 0.0
    %1795 = vmatprep.subr.mxu0 0.0
    %1796 = vmatpush2.msra.mxu0 0.0
    %1797 = vmatprep.subr.mxu0 0.0
    %1798 = vmatpush2.msra.mxu0 0.0
    %1799 = vmatprep.subr.mxu0 0.0
    %1800 = vmatpush2.msra.mxu0 0.0
    %1801 = vmatprep.subr.mxu0 0.0
    %1802 = vmatpush2.msra.mxu0 0.0
    %1803 = vmatprep.subr.mxu0 0.0
    %1804 = vmatpush2.msra.mxu0 0.0
    %1805 = vmatprep.subr.mxu0 0.0
    %1806 = vmatpush2.msra.mxu0 0.0
    %1807 = vmatprep.subr.mxu0 0.0
    %1808 = vmatpush2.msra.mxu0 0.0
    %1809 = vmatprep.subr.mxu0 0.0
    %1810 = vmatpush2.msra.mxu0 0.0
    %1811 = vmatprep.subr.mxu0 0.0
    %1812 = vmatpush2.msra.mxu0 0.0
    %1813 = vmatprep.subr.mxu0 0.0
    %1814 = vmatpush2.msra.mxu0 0.0
    %1815 = vmatprep.subr.mxu0 0.0
    %1816 = vmatpush2.msra.mxu0 0.0
    %1817 = vmatprep.mubr.f32.mxu0 0.0
    %1818 = vmatmul.mubr.f32.gmra.mxu0 %v1591
    %v1819 = vpop.f32.mrf.mxu0
    %v1820 = vadd.f32 %v280, %v1819
    %v1821 = vpop.f32.mrf.mxu0
    %1822 = vdwg.mxu0
    %v1823 = vmax.f32 %v1820, 0.0
    %s1824 = scalar_lea.vmem %s6, 32
    %v1825 = vld [vmem:[%s1824] sm:$0xff]
    %v1826 = vld [vmem:[%s1824 + $0x8] sm:$0xff]
    %s1827 = scalar_lea.vmem %s7, 2
    %v1828 = vld [vmem:[%s1827] sm:$0x1]
    %v1830 = vlaneseq
    %v1831 = vshrl.u32 %v1830, 7
    %v1832 = vsub.s32 0, %v1831
    %v1833 = vrot.slane %v1828, %v1832
    %v1836 = vsel %vm494, %v1823, 0
    %1838 = vmatprep.subr.mxu0 0.0
    %1839 = vmatpush1.msra.mxu0 0.0
    %1840 = vmatprep.subr.mxu0 0.0
    %1841 = vmatpush1.msra.mxu0 0.0
    %1842 = vmatprep.subr.mxu0 0.0
    %1843 = vmatpush1.msra.mxu0 0.0
    %1844 = vmatprep.subr.mxu0 0.0
    %1845 = vmatpush1.msra.mxu0 0.0
    %1846 = vmatprep.subr.mxu0 0.0
    %1847 = vmatpush1.msra.mxu0 0.0
    %1848 = vmatprep.subr.mxu0 0.0
    %1849 = vmatpush1.msra.mxu0 0.0
    %1850 = vmatprep.subr.mxu0 0.0
    %1851 = vmatpush1.msra.mxu0 0.0
    %1852 = vmatprep.subr.mxu0 0.0
    %1853 = vmatpush1.msra.mxu0 0.0
    %1854 = vmatprep.subr.mxu0 0.0
    %1855 = vmatpush1.msra.mxu0 0.0
    %1856 = vmatprep.subr.mxu0 0.0
    %1857 = vmatpush1.msra.mxu0 0.0
    %1858 = vmatprep.subr.mxu0 0.0
    %1859 = vmatpush1.msra.mxu0 0.0
    %1860 = vmatprep.subr.mxu0 0.0
    %1861 = vmatpush1.msra.mxu0 0.0
    %1862 = vmatprep.subr.mxu0 0.0
    %1863 = vmatpush1.msra.mxu0 0.0
    %1864 = vmatprep.subr.mxu0 0.0
    %1865 = vmatpush1.msra.mxu0 0.0
    %1866 = vmatprep.subr.mxu0 0.0
    %1867 = vmatpush1.msra.mxu0 %v1826
    %1868 = vmatprep.subr.mxu0 0.0
    %1869 = vmatpush1.msra.mxu0 %v1825
    %1870 = vmatprep.subr.mxu0 0.0
    %1871 = vmatpush2.msra.mxu0 0.0
    %1872 = vmatprep.subr.mxu0 0.0
    %1873 = vmatpush2.msra.mxu0 0.0
    %1874 = vmatprep.subr.mxu0 0.0
    %1875 = vmatpush2.msra.mxu0 0.0
    %1876 = vmatprep.subr.mxu0 0.0
    %1877 = vmatpush2.msra.mxu0 0.0
    %1878 = vmatprep.subr.mxu0 0.0
    %1879 = vmatpush2.msra.mxu0 0.0
    %1880 = vmatprep.subr.mxu0 0.0
    %1881 = vmatpush2.msra.mxu0 0.0
    %1882 = vmatprep.subr.mxu0 0.0
    %1883 = vmatpush2.msra.mxu0 0.0
    %1884 = vmatprep.subr.mxu0 0.0
    %1885 = vmatpush2.msra.mxu0 0.0
    %1886 = vmatprep.subr.mxu0 0.0
    %1887 = vmatpush2.msra.mxu0 0.0
    %1888 = vmatprep.subr.mxu0 0.0
    %1889 = vmatpush2.msra.mxu0 0.0
    %1890 = vmatprep.subr.mxu0 0.0
    %1891 = vmatpush2.msra.mxu0 0.0
    %1892 = vmatprep.subr.mxu0 0.0
    %1893 = vmatpush2.msra.mxu0 0.0
    %1894 = vmatprep.subr.mxu0 0.0
    %1895 = vmatpush2.msra.mxu0 0.0
    %1896 = vmatprep.subr.mxu0 0.0
    %1897 = vmatpush2.msra.mxu0 0.0
    %1898 = vmatprep.subr.mxu0 0.0
    %1899 = vmatpush2.msra.mxu0 0.0
    %1900 = vmatprep.subr.mxu0 0.0
    %1901 = vmatpush2.msra.mxu0 0.0
    %1902 = vmatprep.mubr.f32.mxu0 0.0
    %1903 = vmatmul.mubr.f32.gmra.mxu0 %v1836
    %v1904 = vpop.f32.mrf.mxu0
    %v1905 = vadd.f32 %v1833, %v1904
    %v1906 = vpop.f32.mrf.mxu0
    %1907 = vdwg.mxu0
    %v1908 = vsub.f32 0.0, %v1905
    %v1909 = vmul.f32 %v1908, 1.442695
    %v1910 = vpow.pop %v1909
    %v1911 = vadd.f32 %v1910, 1.0
    %v1912 = vrcp.pop %v1911
    %v1913 = vmul.f32 1.0, %v1912
    %1915 = vset.pattern.permute.xlu0 0
    %1916 = vperm.xlu0 %1915, %v1913
    %v1917 = vpop.permute.xlu0 %1916
    %v1919 = vmul.f32 %v1917, %v1747
    %v1920 = vsub.f32 %v1377, %v1919
    %v1921 = vand.u32 2147483647, %v1920
    %vm1922 = vcmp.le.f32.partialorder %v1921, 0.7853982
    %vm1923 = vcmp.lt.s32.totalorder %v1920, 0
    %v1924 = vand.u32 %v1920, 2139095040
    %v1925 = vshrl.u32 %v1924, 23
    %v1926 = vsub.s32 %v1925, 127
    %v1927 = vand.u32 2147483647, %v1920
    %v1928 = vand.u32 %v1927, 8388607
    %v1929 = vor.u32 %v1928, 8388608
    %v1930 = vsub.s32 0, %v1929
    %v1931 = vadd.s32 %v1926, 1
    %vm1932 = vcmp.gt.s32.totalorder %v1931, 0
    %v1933 = vsel %vm1932, %v1931, 0
    %v1934 = vshrl.u32 %v1933, 5
    %v1935 = vand.u32 %v1933, 31
    %v1936 = vsub.s32 32, %v1935
    %v1937 = vshrl.u32 683565275, %v1936
    %v1938 = vshll.u32 683565275, %v1935
    %v1939 = vshrl.u32 2475754826, %v1936
    %v1940 = vor.u32 %v1938, %v1939
    %v1941 = vshll.u32 2475754826, %v1935
    %v1942 = vshrl.u32 2131351028, %v1936
    %v1943 = vor.u32 %v1941, %v1942
    %v1944 = vshll.u32 2131351028, %v1935
    %v1945 = vshrl.u32 2102212464, %v1936
    %v1946 = vor.u32 %v1944, %v1945
    %v1947 = vshll.u32 2102212464, %v1935
    %v1948 = vshrl.u32 920167782, %v1936
    %v1949 = vor.u32 %v1947, %v1948
    %v1950 = vshll.u32 920167782, %v1935
    %v1951 = vshrl.u32 1326507024, %v1936
    %v1952 = vor.u32 %v1950, %v1951
    %vm1953 = vcmp.lt.s32.totalorder %v1934, 1
    %vm1954 = vcmp.lt.s32.totalorder %v1934, 2
    %vm1955 = vcmp.lt.s32.totalorder %v1934, 3
    %vm1956 = vcmp.lt.s32.totalorder %v1934, 4
    %v1957 = vsel %vm1953, %v1937, %v1940
    %v1958 = vsel %vm1956, %v1946, 2102212464
    %v1959 = vsel %vm1955, %v1943, %v1958
    %v1960 = vsel %vm1954, %v1957, %v1959
    %v1961 = vsel %vm1953, %v1940, %v1943
    %v1962 = vsel %vm1956, %v1949, 920167782
    %v1963 = vsel %vm1955, %v1946, %v1962
    %v1964 = vsel %vm1954, %v1961, %v1963
    %v1965 = vsel %vm1953, %v1943, %v1946
    %v1966 = vsel %vm1956, %v1952, 1326507024
    %v1967 = vsel %vm1955, %v1949, %v1966
    %v1968 = vsel %vm1954, %v1965, %v1967
    %v1969 = vshll.u32 %v1929, 8
    %v1970 = vmul.u32.u64.compose %v1969, %v1968
    %v1971 = vextract.low.u32 %v1970
    %v1972 = vextract.high.u32 %v1970
    %v1973 = vmul.u32.u64.compose %v1969, %v1964
    %v1974 = vextract.low.u32 %v1973
    %v1975 = vextract.high.u32 %v1973
    %v1976 = vmul.u32 %v1969, %v1960
    %v1977 = vadd.s32 %v1972, %v1974
    %vm1978 = vc.u32 %v1972, %v1974
    %v1979 = vadd.s32 %v1975, 1
    %v1980 = vsel %vm1978, %v1979, %v1975
    %v1981 = vadd.s32 %v1976, %v1980
    %v1982 = vadd.s32 %v1981, 536870912
    %v1983 = vshrl.u32 %v1982, 30
    %v1984 = vshll.u32 %v1983, 30
    %v1985 = vsub.s32 %v1981, %v1984
    %vm1986 = vcmp.lt.s32.totalorder %v1985, 0
    %v1987 = vsub.s32 0, %v1985
    %v1988 = vsel %vm1986, %v1987, %v1985
    %v1989 = vclz %v1988
    %v1990 = vsub.s32 %v1989, 2
    %vm1991 = vcmp.gt.s32.totalorder 0, %v1990
    %v1992 = vsel %vm1991, 0, %v1990
    %v1993 = vsub.s32 32, %v1992
    %v1994 = vshll.u32 %v1985, %v1992
    %v1995 = vshrl.u32 %v1977, %v1993
    %v1996 = vor.u32 %v1994, %v1995
    %v1997 = vsub.s32 4294967266, %v1992
    %v1998 = vadd.s32 %v1997, 127
    %v1999 = vshll.u32 %v1998, 23
    %v2000 = vor.u32 4788187, %v1999
    %v2001 = vand.u32 2147483647, %v2000
    %v2003 = vcvt.s32.f32 %v1996
    %v2004 = vmul.f32 %v2003, %v2001
    %v2005 = vxor.u32 %v2004, 2147483648
    %v2006 = vsel %vm1923, %v2005, %v2004
    %v2007 = vsub.s32 4, %v1983
    %v2008 = vsel %vm1923, %v2007, %v1983
    %v2009 = vsel %vm1922, %v1920, %v2006
    %v2010 = vsel %vm1922, 0, %v2008
    %v2011 = vcosq.f32.pop %v2009
    %v2012 = vsinq.f32.pop %v2009
    %vm2013 = vweird.f32 %v1920
    %v2014 = vand.u32 %v2010, 3
    %vm2015 = vcmp.lt.s32.totalorder %v2014, 2
    %vm2016 = vcmp.eq.s32.totalorder %v2014, 0
    %v2017 = vxor.u32 %v2012, 2147483648
    %v2018 = vsel %vm2016, %v2011, %v2017
    %vm2019 = vcmp.eq.s32.totalorder %v2014, 2
    %v2020 = vxor.u32 %v2011, 2147483648
    %v2021 = vsel %vm2019, %v2020, %v2012
    %v2022 = vsel %vm2015, %v2018, %v2021
    %v2023 = vsel %vm2013, nan, %v2022
    %v2024 = vand.u32 2147483647, %v1920
    %vm2025 = vcmp.le.f32.partialorder %v2024, 0.7853982
    %vm2026 = vcmp.lt.s32.totalorder %v1920, 0
    %v2027 = vand.u32 %v1920, 2139095040
    %v2028 = vshrl.u32 %v2027, 23
    %v2029 = vsub.s32 %v2028, 127
    %v2030 = vand.u32 2147483647, %v1920
    %v2031 = vand.u32 %v2030, 8388607
    %v2032 = vor.u32 %v2031, 8388608
    %v2033 = vsub.s32 0, %v2032
    %v2034 = vadd.s32 %v2029, 1
    %vm2035 = vcmp.gt.s32.totalorder %v2034, 0
    %v2036 = vsel %vm2035, %v2034, 0
    %v2037 = vshrl.u32 %v2036, 5
    %v2038 = vand.u32 %v2036, 31
    %v2039 = vsub.s32 32, %v2038
    %v2040 = vshrl.u32 683565275, %v2039
    %v2041 = vshll.u32 683565275, %v2038
    %v2042 = vshrl.u32 2475754826, %v2039
    %v2043 = vor.u32 %v2041, %v2042
    %v2044 = vshll.u32 2475754826, %v2038
    %v2045 = vshrl.u32 2131351028, %v2039
    %v2046 = vor.u32 %v2044, %v2045
    %v2047 = vshll.u32 2131351028, %v2038
    %v2048 = vshrl.u32 2102212464, %v2039
    %v2049 = vor.u32 %v2047, %v2048
    %v2050 = vshll.u32 2102212464, %v2038
    %v2051 = vshrl.u32 920167782, %v2039
    %v2052 = vor.u32 %v2050, %v2051
    %v2053 = vshll.u32 920167782, %v2038
    %v2054 = vshrl.u32 1326507024, %v2039
    %v2055 = vor.u32 %v2053, %v2054
    %vm2056 = vcmp.lt.s32.totalorder %v2037, 1
    %vm2057 = vcmp.lt.s32.totalorder %v2037, 2
    %vm2058 = vcmp.lt.s32.totalorder %v2037, 3
    %vm2059 = vcmp.lt.s32.totalorder %v2037, 4
    %v2060 = vsel %vm2056, %v2040, %v2043
    %v2061 = vsel %vm2059, %v2049, 2102212464
    %v2062 = vsel %vm2058, %v2046, %v2061
    %v2063 = vsel %vm2057, %v2060, %v2062
    %v2064 = vsel %vm2056, %v2043, %v2046
    %v2065 = vsel %vm2059, %v2052, 920167782
    %v2066 = vsel %vm2058, %v2049, %v2065
    %v2067 = vsel %vm2057, %v2064, %v2066
    %v2068 = vsel %vm2056, %v2046, %v2049
    %v2069 = vsel %vm2059, %v2055, 1326507024
    %v2070 = vsel %vm2058, %v2052, %v2069
    %v2071 = vsel %vm2057, %v2068, %v2070
    %v2072 = vshll.u32 %v2032, 8
    %v2073 = vmul.u32.u64.compose %v2072, %v2071
    %v2074 = vextract.low.u32 %v2073
    %v2075 = vextract.high.u32 %v2073
    %v2076 = vmul.u32.u64.compose %v2072, %v2067
    %v2077 = vextract.low.u32 %v2076
    %v2078 = vextract.high.u32 %v2076
    %v2079 = vmul.u32 %v2072, %v2063
    %v2080 = vadd.s32 %v2075, %v2077
    %vm2081 = vc.u32 %v2075, %v2077
    %v2082 = vadd.s32 %v2078, 1
    %v2083 = vsel %vm2081, %v2082, %v2078
    %v2084 = vadd.s32 %v2079, %v2083
    %v2085 = vadd.s32 %v2084, 536870912
    %v2086 = vshrl.u32 %v2085, 30
    %v2087 = vshll.u32 %v2086, 30
    %v2088 = vsub.s32 %v2084, %v2087
    %vm2089 = vcmp.lt.s32.totalorder %v2088, 0
    %v2090 = vsub.s32 0, %v2088
    %v2091 = vsel %vm2089, %v2090, %v2088
    %v2092 = vclz %v2091
    %v2093 = vsub.s32 %v2092, 2
    %vm2094 = vcmp.gt.s32.totalorder 0, %v2093
    %v2095 = vsel %vm2094, 0, %v2093
    %v2096 = vsub.s32 32, %v2095
    %v2097 = vshll.u32 %v2088, %v2095
    %v2098 = vshrl.u32 %v2080, %v2096
    %v2099 = vor.u32 %v2097, %v2098
    %v2100 = vsub.s32 4294967266, %v2095
    %v2101 = vadd.s32 %v2100, 127
    %v2102 = vshll.u32 %v2101, 23
    %v2103 = vor.u32 4788187, %v2102
    %v2104 = vand.u32 2147483647, %v2103
    %v2106 = vcvt.s32.f32 %v2099
    %v2107 = vmul.f32 %v2106, %v2104
    %v2108 = vxor.u32 %v2107, 2147483648
    %v2109 = vsel %vm2026, %v2108, %v2107
    %v2110 = vsub.s32 4, %v2086
    %v2111 = vsel %vm2026, %v2110, %v2086
    %v2112 = vsel %vm2025, %v1920, %v2109
    %v2113 = vsel %vm2025, 0, %v2111
    %v2114 = vcosq.f32.pop %v2112
    %v2115 = vsinq.f32.pop %v2112
    %vm2116 = vweird.f32 %v1920
    %v2117 = vadd.s32 %v2113, 3
    %v2118 = vand.u32 %v2117, 3
    %vm2119 = vcmp.lt.s32.totalorder %v2118, 2
    %vm2120 = vcmp.eq.s32.totalorder %v2118, 0
    %v2121 = vxor.u32 %v2115, 2147483648
    %v2122 = vsel %vm2120, %v2114, %v2121
    %vm2123 = vcmp.eq.s32.totalorder %v2118, 2
    %v2124 = vxor.u32 %v2114, 2147483648
    %v2125 = vsel %vm2123, %v2124, %v2115
    %v2126 = vsel %vm2119, %v2122, %v2125
    %v2127 = vsel %vm2116, nan, %v2126
    %2129 = vrot.lane.b32.xlu0 %v2127, 16
    %v2130 = vpop.permute.xlu0 %2129
    %v2132 = vsel %vm494, %v2023, %v2130
    %2133 = vrot.lane.b32.xlu0 %v1046, 32
    %v2134 = vpop.permute.xlu0 %2133
    %2136 = vrot.lane.b32.xlu0 %v1589, 64
    %v2137 = vpop.permute.xlu0 %2136
    %2140 = vrot.lane.b32.xlu0 %v2132, 96
    %v2141 = vpop.permute.xlu0 %2140
    %v2143 = vsel %vm500, %v495, %v2134
    %vm2144 = vcmask 523264
    %v2145 = vsel %vm2144, %v2143, %v2137
    %vm2146 = vcmask 785408
    %v2147 = vsel %vm2146, %v2145, %v2141
    %2148 = vst [vmem:[#allocation2] sm:$0x3] %v2147
    %2149 = vrot.lane.b32.xlu0 %v1370, 1
    %v2150 = vpop.permute.xlu0 %2149
    %2152 = vrot.lane.b32.xlu0 %v1913, 2
    %v2153 = vpop.permute.xlu0 %2152
    %vm2155 = vcmask 7168
    %v2156 = vsel %vm2155, %v827, %v2150
    %vm2157 = vcmask 15360
    %v2158 = vsel %vm2157, %v2156, %v2153
    %vm2159 = vcmask 23552
    %v2160 = vsel %vm2159, %v2158, 0.0
    %2161 = vst [vmem:[#allocation4] sm:$0x3] %v2160
    // Predicated region
    $region34: #{tpu_custom_call.1} parent=1 // pred_check
      _
    $region35: #{tpu_custom_call.1} parent=1 // pred_check_branch
      %2163 = sbr.rel (0) target = $region37
    $region36: #{tpu_custom_call.1} parent=1 // pred_region
      %s2165 = ssub.s32 32, 32
      %2166 = vsyncadd [#allocation3], %s2165
      %s2168 = sshll.u32 [#allocation2], 4
      %s2169 = int_to_ptr.vmem [resolvable:$true] %s2168
      %2171 = dma.vmem_to_hbm [thread:$0]  %s2169, 32, %s8, [#allocation3]
    $region37: #{tpu_custom_call.1} parent=1 // pred_fallthru
      _
    // Predicated region
    $region38: #{tpu_custom_call.1} parent=1 // pred_check
      _
    $region39: #{tpu_custom_call.1} parent=1 // pred_check_branch
      %2173 = sbr.rel (0) target = $region41
    $region40: #{tpu_custom_call.1} parent=1 // pred_region
      %s2175 = ssub.s32 32, 32
      %2176 = vsyncadd [#allocation5], %s2175
      %s2178 = sshll.u32 [#allocation4], 4
      %s2179 = int_to_ptr.vmem [resolvable:$true] %s2178
      %2181 = dma.vmem_to_hbm [thread:$0]  %s2179, 32, %s9, [#allocation5]
    $region41: #{tpu_custom_call.1} parent=1 // pred_fallthru
      _
    // Predicated region
    $region42: #{tpu_custom_call.1} parent=1 // pred_check
      _
    $region43: #{tpu_custom_call.1} parent=1 // pred_check_branch
      %2183 = sbr.rel (0) target = $region45
    $region44: #{tpu_custom_call.1} parent=1 // pred_region
      %2184 = dma.done [#allocation3], 32
    $region45: #{tpu_custom_call.1} parent=1 // pred_fallthru
      _
    // Predicated region
    $region46: #{tpu_custom_call.1} parent=1 // pred_check
      _
    $region47: #{tpu_custom_call.1} parent=1 // pred_check_branch
      %2186 = sbr.rel (0) target = $region49
    $region48: #{tpu_custom_call.1} parent=1 // pred_region
      %2187 = dma.done [#allocation5], 32
    $region49: #{tpu_custom_call.1} parent=1 // pred_fallthru
      _
    %2188 = vsyncpa [#allocation3], 1
    %2189 = vsyncpa [#allocation5], 1

</llo_original>
